<compile_context>
chip_gen: v7x
topology: tpu7x:2x2x1
jax: 0.10.0
libtpu: 0.0.40
codegen_flags: <defaults>
</compile_context>

<pallas_src>
import functools

import jax
import jax.numpy as jnp
from jax.experimental import pallas as pl
from jax.experimental.pallas import tpu as pltpu

LN_EPS = 1e-5  # PyTorch nn.LayerNorm default


def _layernorm(x, gamma, beta):
    mu = jnp.mean(x, axis=-1, keepdims=True)
    var = jnp.mean((x - mu) ** 2, axis=-1, keepdims=True)
    return (x - mu) * jax.lax.rsqrt(var + LN_EPS) * gamma + beta


def sce_kernel(roi_ref, img_ref,
               wct_ref, bc_ref,            # downsample2 (1x1 conv), weight [NFC, D]
               we_ref, be_ref,             # emb_roi linear
               g1_ref, bt1_ref,            # layernorm1
               w1_ref, bb1_ref,            # FFN linear 1
               w2_ref, bb2_ref,            # FFN linear 2
               g2_ref, bt2_ref,            # layernorm2
               out_ref, *, btb):
    # Hoist weight loads out of the per-batch loop.
    wct = wct_ref[...]          # [NFC, D]   bf16
    bc = bc_ref[...]            # [NFC, 1]   f32
    we = we_ref[...]            # [NFB, NFC] bf16
    be = be_ref[...]            # [1, NFC]   f32
    w1 = w1_ref[...]
    bb1 = bb1_ref[...]
    w2 = w2_ref[...]
    bb2 = bb2_ref[...]
    g1 = g1_ref[...]
    bt1 = bt1_ref[...]
    g2 = g2_ref[...]
    bt2 = bt2_ref[...]

    # Static unroll over the batch elements folded into this grid step (btb is
    # small, e.g. 2) so Mosaic can interleave the independent matmul chains.
    for b in range(btb):
        img_b = img_ref[b]      # [D, HW]  bf16 (native channel-major layout)
        roi_b = roi_ref[b]      # [N, NFB] bf16

        # 1x1 conv over channels, kept transposed: [NFC, D] @ [D, HW] + bias
        img_ds_t = jnp.dot(wct, img_b,
                           preferred_element_type=jnp.float32) + bc  # [NFC, HW]
        # roi embedding: [N, NFB] @ [NFB, NFC] + bias
        emb = jnp.dot(roi_b, we,
                      preferred_element_type=jnp.float32) + be       # [N, NFC]

        # attention scores over pixels: [N, NFC] @ [NFC, HW] (no transpose)
        s = jnp.dot(emb, img_ds_t, preferred_element_type=jnp.float32)
        s = s - jnp.max(s, axis=-1, keepdims=True)
        p = jnp.exp(s)
        # softmax normalization via approx reciprocal (EUP slot, otherwise idle)
        attn = p * pl.reciprocal(jnp.sum(p, axis=-1, keepdims=True), approx=True)

        # context encoding: contract the HW axis of [N, HW] with [NFC, HW]
        ctx = jax.lax.dot_general(attn, img_ds_t, (((1,), (1,)), ((), ())),
                                  preferred_element_type=jnp.float32)  # [N, NFC]

        # TODO(synk): dropout (context_dropout_ratio) is an inference-mode identity.
        x = _layernorm(ctx + emb, g1, bt1)

        # FFN: Linear -> ReLU -> (Dropout: identity) -> Linear
        h = jnp.maximum(
            jnp.dot(x, w1, preferred_element_type=jnp.float32) + bb1, 0.0)
        f = jnp.dot(h, w2, preferred_element_type=jnp.float32) + bb2

        out_ref[b] = _layernorm(x + f, g2, bt2)


def sce_forward(roi, img, params):
    """roi: [BT, N, NFB] f32 ; img: [BT, D, HW] f32 (NCHW reshaped) -> [BT*N, NFC]."""
    BT, N, NFB = roi.shape
    _, D, HW = img.shape
    NFC = params["wct"].shape[0]

    # Fold BT into blocks; keep a 2-wide parallel grid for v7x's 2 TensorCores.
    n_blocks = 2 if (BT >= 2 and BT % 2 == 0) else 1
    btb = BT // n_blocks

    # Mixed precision: bf16 inputs for the big matmuls, f32 everywhere else.
    roi_bf = roi.astype(jnp.bfloat16)
    img_bf = img.astype(jnp.bfloat16)
    wct_bf = params["wct"].astype(jnp.bfloat16)
    we_bf = params["we"].astype(jnp.bfloat16)

    def full_spec(shape):
        nd = len(shape)
        return pl.BlockSpec(shape, lambda i: (0,) * nd)   # constant -> resident

    in_specs = [
        pl.BlockSpec((btb, N, NFB), lambda i: (i, 0, 0)),   # roi (bf16)
        pl.BlockSpec((btb, D, HW), lambda i: (i, 0, 0)),    # image (bf16, D-major)
        full_spec((NFC, D)),    # wct
        full_spec((NFC, 1)),    # bc (column bias, broadcasts over HW)
        full_spec((NFB, NFC)),  # we
        full_spec((1, NFC)),    # be
        full_spec((1, NFC)),    # ln1 gamma
        full_spec((1, NFC)),    # ln1 beta
        full_spec((NFC, NFC)),  # ffn w1
        full_spec((1, NFC)),    # ffn b1
        full_spec((NFC, NFC)),  # ffn w2
        full_spec((1, NFC)),    # ffn b2
        full_spec((1, NFC)),    # ln2 gamma
        full_spec((1, NFC)),    # ln2 beta
    ]

    inputs = (roi_bf, img_bf,
              wct_bf, params["bc"],
              we_bf, params["be"],
              params["g1"], params["bt1"],
              params["w1"], params["bb1"],
              params["w2"], params["bb2"],
              params["g2"], params["bt2"])

    # Scheduling hint for XLA so the small custom call overlaps neighbors.
    flops = 2 * BT * (HW * D * NFC        # 1x1 conv
                      + N * NFB * NFC     # roi embedding
                      + 2 * N * HW * NFC  # scores + context
                      + 2 * N * NFC * NFC)  # FFN
    bytes_accessed = int(sum(int(a.size) * a.dtype.itemsize for a in inputs)
                         + BT * N * NFC * 4)
    cost = pl.CostEstimate(flops=int(flops),
                           transcendentals=int(BT * N * HW),
                           bytes_accessed=bytes_accessed)

    out = pl.pallas_call(
        functools.partial(sce_kernel, btb=btb),
        out_shape=jax.ShapeDtypeStruct((BT, N, NFC), jnp.float32),
        grid_spec=pltpu.PrefetchScalarGridSpec(
            num_scalar_prefetch=0,
            grid=(n_blocks,),
            in_specs=in_specs,
            out_specs=pl.BlockSpec((btb, N, NFC), lambda i: (i, 0, 0)),
        ),
        compiler_params=pltpu.CompilerParams(
            dimension_semantics=("parallel",)),
        cost_estimate=cost,
    )(*inputs)

    return out.reshape(BT * N, NFC)


def reference_forward(roi, img, params):
    """Pure-JAX reference mirroring the PyTorch forward (eval mode) with the
    same bf16 input rounding on the matmul operands as the kernel."""
    BT, N, _ = roi.shape
    NFC = params["wct"].shape[0]
    roi_f = roi.astype(jnp.bfloat16).astype(jnp.float32)
    img_f = img.astype(jnp.bfloat16).astype(jnp.float32)
    wct_f = params["wct"].astype(jnp.bfloat16).astype(jnp.float32)
    we_f = params["we"].astype(jnp.bfloat16).astype(jnp.float32)

    img_ds_t = jnp.einsum("cd,bdp->bcp", wct_f, img_f) + params["bc"]   # [BT,NFC,HW]
    emb = jnp.einsum("bnf,fc->bnc", roi_f, we_f) + params["be"]         # [BT,N,NFC]
    s = jnp.einsum("bnc,bcp->bnp", emb, img_ds_t)
    attn = jax.nn.softmax(s, axis=-1)
    ctx = jnp.einsum("bnp,bcp->bnc", attn, img_ds_t)
    x = _layernorm(ctx + emb, params["g1"], params["bt1"])
    h = jnp.maximum(jnp.einsum("bnc,ck->bnk", x, params["w1"]) + params["bb1"], 0.0)
    f = jnp.einsum("bnk,kc->bnc", h, params["w2"]) + params["bb2"]
    y = _layernorm(x + f, params["g2"], params["bt2"])
    return y.reshape(BT * N, NFC)


if __name__ == "__main__":
    # Small shapes consistent with the module's forward (layer_id == 1 path).
    B, T, N = 1, 4, 8
    NFB = 32              # roi feature dim
    NFC = 32              # num_features_context
    D = 768               # conv input channels (hard-coded in the module)
    OH, OW = 8, 8
    BT, HW = B * T, OH * OW

    key = jax.random.PRNGKey(0)
    keys = jax.random.split(key, 12)

    # Inputs: roi_feature [B, T, N, NFB], image_feature NCHW [BT, D, OH, OW]
    roi_feature = jax.random.normal(keys[0], (B, T, N, NFB), jnp.float32)
    image_feature = jax.random.normal(keys[1], (BT, D, OH, OW), jnp.float32)

    # Deterministic parameter init (synthetic; shapes per module __init__).
    def kaiming(k, shape, fan_in):
        return jax.random.normal(k, shape, jnp.float32) * jnp.sqrt(2.0 / fan_in)

    params = {
        # downsample2: Conv2d(768, NFC, k=1) weight [NFC, 768, 1, 1] -> [NFC, D]
        "wct": kaiming(keys[2], (NFC, D), D),
        "bc": jnp.zeros((NFC, 1), jnp.float32),
        # emb_roi: Linear(NFB, NFC) -> weight stored transposed as [NFB, NFC]
        "we": kaiming(keys[3], (NFB, NFC), NFB),
        "be": 0.01 * jax.random.normal(keys[4], (1, NFC), jnp.float32),
        # layernorm1
        "g1": jnp.ones((1, NFC), jnp.float32),
        "bt1": jnp.zeros((1, NFC), jnp.float32),
        # FFN
        "w1": kaiming(keys[5], (NFC, NFC), NFC),
        "bb1": 0.01 * jax.random.normal(keys[6], (1, NFC), jnp.float32),
        "w2": kaiming(keys[7], (NFC, NFC), NFC),
        "bb2": 0.01 * jax.random.normal(keys[8], (1, NFC), jnp.float32),
        # layernorm2
        "g2": jnp.ones((1, NFC), jnp.float32),
        "bt2": jnp.zeros((1, NFC), jnp.float32),
    }

    # Glue: both are free reshapes (no transpose, no extra HBM pass).
    roi_flat = roi_feature.reshape(BT, N, NFB)
    img_flat = image_feature.reshape(BT, D, OH * OW)   # keep native D-major layout

    out = sce_forward(roi_flat, img_flat, params)
    out = jax.block_until_ready(out)

    ref = reference_forward(roi_flat, img_flat, params)
    assert out.shape == (BT * N, NFC)
    # Tolerance covers the approx EUP reciprocal in softmax; matmul inputs are
    # identically bf16-rounded in kernel and reference, accumulation is f32.
    assert jnp.allclose(out, ref, atol=1e-2, rtol=1e-2), "mismatch vs reference"

    print("KERNEL_OK")
</pallas_src>

<mosaic_0001>
module attributes {stable_mosaic.version = 11 : i64} {
  func.func @sce_kernel(%arg0: i32, %arg1: memref<2x8x32xbf16, #tpu.memory_space<vmem>>, %arg2: memref<2x768x64xbf16, #tpu.memory_space<vmem>>, %arg3: memref<32x768xbf16, #tpu.memory_space<vmem>>, %arg4: memref<32x1xf32, #tpu.memory_space<vmem>>, %arg5: memref<32x32xbf16, #tpu.memory_space<vmem>>, %arg6: memref<1x32xf32, #tpu.memory_space<vmem>>, %arg7: memref<1x32xf32, #tpu.memory_space<vmem>>, %arg8: memref<1x32xf32, #tpu.memory_space<vmem>>, %arg9: memref<32x32xf32, #tpu.memory_space<vmem>>, %arg10: memref<1x32xf32, #tpu.memory_space<vmem>>, %arg11: memref<32x32xf32, #tpu.memory_space<vmem>>, %arg12: memref<1x32xf32, #tpu.memory_space<vmem>>, %arg13: memref<1x32xf32, #tpu.memory_space<vmem>>, %arg14: memref<1x32xf32, #tpu.memory_space<vmem>>, %arg15: memref<2x8x32xf32, #tpu.memory_space<vmem>>) attributes {dimension_semantics = [#tpu.dimension_semantics<parallel>], iteration_bounds = array<i64: 2>, scalar_prefetch = 0 : i64, scratch_operands = 0 : i64, tpu.core_type = #tpu.core_type<tc>, window_params = [{transform_indices = @transform_0, window_bounds = array<i64: 2, 8, 32>}, {transform_indices = @transform_1, window_bounds = array<i64: 2, 768, 64>}, {pipeline_mode = #tpu.pipeline_mode<synchronous>, transform_indices = @transform_2, window_bounds = array<i64: 32, 768>}, {pipeline_mode = #tpu.pipeline_mode<synchronous>, transform_indices = @transform_3, window_bounds = array<i64: 32, 1>}, {pipeline_mode = #tpu.pipeline_mode<synchronous>, transform_indices = @transform_4, window_bounds = array<i64: 32, 32>}, {pipeline_mode = #tpu.pipeline_mode<synchronous>, transform_indices = @transform_5, window_bounds = array<i64: 1, 32>}, {pipeline_mode = #tpu.pipeline_mode<synchronous>, transform_indices = @transform_6, window_bounds = array<i64: 1, 32>}, {pipeline_mode = #tpu.pipeline_mode<synchronous>, transform_indices = @transform_7, window_bounds = array<i64: 1, 32>}, {pipeline_mode = #tpu.pipeline_mode<synchronous>, transform_indices = @transform_8, window_bounds = array<i64: 32, 32>}, {pipeline_mode = #tpu.pipeline_mode<synchronous>, transform_indices = @transform_9, window_bounds = array<i64: 1, 32>}, {pipeline_mode = #tpu.pipeline_mode<synchronous>, transform_indices = @transform_10, window_bounds = array<i64: 32, 32>}, {pipeline_mode = #tpu.pipeline_mode<synchronous>, transform_indices = @transform_11, window_bounds = array<i64: 1, 32>}, {pipeline_mode = #tpu.pipeline_mode<synchronous>, transform_indices = @transform_12, window_bounds = array<i64: 1, 32>}, {pipeline_mode = #tpu.pipeline_mode<synchronous>, transform_indices = @transform_13, window_bounds = array<i64: 1, 32>}, {transform_indices = @transform_14, window_bounds = array<i64: 2, 8, 32>}]} {
    %c0 = arith.constant 0 : index
    %c0_0 = arith.constant 0 : index
    %0 = vector.load %arg3[%c0, %c0_0] : memref<32x768xbf16, #tpu.memory_space<vmem>>, vector<32x768xbf16>
    %c0_1 = arith.constant 0 : index
    %c0_2 = arith.constant 0 : index
    %1 = vector.load %arg4[%c0_1, %c0_2] : memref<32x1xf32, #tpu.memory_space<vmem>>, vector<32x1xf32>
    %c0_3 = arith.constant 0 : index
    %c0_4 = arith.constant 0 : index
    %2 = vector.load %arg5[%c0_3, %c0_4] : memref<32x32xbf16, #tpu.memory_space<vmem>>, vector<32x32xbf16>
    %c0_5 = arith.constant 0 : index
    %c0_6 = arith.constant 0 : index
    %3 = vector.load %arg6[%c0_5, %c0_6] : memref<1x32xf32, #tpu.memory_space<vmem>>, vector<1x32xf32>
    %c0_7 = arith.constant 0 : index
    %c0_8 = arith.constant 0 : index
    %4 = vector.load %arg9[%c0_7, %c0_8] : memref<32x32xf32, #tpu.memory_space<vmem>>, vector<32x32xf32>
    %c0_9 = arith.constant 0 : index
    %c0_10 = arith.constant 0 : index
    %5 = vector.load %arg10[%c0_9, %c0_10] : memref<1x32xf32, #tpu.memory_space<vmem>>, vector<1x32xf32>
    %c0_11 = arith.constant 0 : index
    %c0_12 = arith.constant 0 : index
    %6 = vector.load %arg11[%c0_11, %c0_12] : memref<32x32xf32, #tpu.memory_space<vmem>>, vector<32x32xf32>
    %c0_13 = arith.constant 0 : index
    %c0_14 = arith.constant 0 : index
    %7 = vector.load %arg12[%c0_13, %c0_14] : memref<1x32xf32, #tpu.memory_space<vmem>>, vector<1x32xf32>
    %c0_15 = arith.constant 0 : index
    %c0_16 = arith.constant 0 : index
    %8 = vector.load %arg7[%c0_15, %c0_16] : memref<1x32xf32, #tpu.memory_space<vmem>>, vector<1x32xf32>
    %c0_17 = arith.constant 0 : index
    %c0_18 = arith.constant 0 : index
    %9 = vector.load %arg8[%c0_17, %c0_18] : memref<1x32xf32, #tpu.memory_space<vmem>>, vector<1x32xf32>
    %c0_19 = arith.constant 0 : index
    %c0_20 = arith.constant 0 : index
    %10 = vector.load %arg13[%c0_19, %c0_20] : memref<1x32xf32, #tpu.memory_space<vmem>>, vector<1x32xf32>
    %c0_21 = arith.constant 0 : index
    %c0_22 = arith.constant 0 : index
    %11 = vector.load %arg14[%c0_21, %c0_22] : memref<1x32xf32, #tpu.memory_space<vmem>>, vector<1x32xf32>
    %c0_23 = arith.constant 0 : index
    %c0_24 = arith.constant 0 : index
    %c0_25 = arith.constant 0 : index
    %12 = vector.load %arg2[%c0_23, %c0_24, %c0_25] : memref<2x768x64xbf16, #tpu.memory_space<vmem>>, vector<1x768x64xbf16>
    %13 = vector.shape_cast %12 : vector<1x768x64xbf16> to vector<768x64xbf16>
    %c0_26 = arith.constant 0 : index
    %c0_27 = arith.constant 0 : index
    %c0_28 = arith.constant 0 : index
    %14 = vector.load %arg1[%c0_26, %c0_27, %c0_28] : memref<2x8x32xbf16, #tpu.memory_space<vmem>>, vector<1x8x32xbf16>
    %15 = vector.shape_cast %14 : vector<1x8x32xbf16> to vector<8x32xbf16>
    %cst = arith.constant dense<0.000000e+00> : vector<32x64xf32>
    %16 = tpu.matmul %0, %13, %cst {dimension_numbers = #tpu.dot_dimension_numbers<[1], [0], [0], [1], [0, 0, 1, 1], [], []>} : vector<32x768xbf16>, vector<768x64xbf16>, vector<32x64xf32> -> vector<32x64xf32>
    %17 = vector.broadcast %1 : vector<32x1xf32> to vector<32x64xf32>
    %18 = arith.addf %16, %17 : vector<32x64xf32>
    %cst_29 = arith.constant dense<0.000000e+00> : vector<8x32xf32>
    %19 = tpu.matmul %15, %2, %cst_29 {dimension_numbers = #tpu.dot_dimension_numbers<[1], [0], [0], [1], [0, 0, 1, 1], [], []>} : vector<8x32xbf16>, vector<32x32xbf16>, vector<8x32xf32> -> vector<8x32xf32>
    %20 = vector.broadcast %3 : vector<1x32xf32> to vector<8x32xf32>
    %21 = arith.addf %19, %20 : vector<8x32xf32>
    %cst_30 = arith.constant dense<0.000000e+00> : vector<8x64xf32>
    %22 = tpu.matmul %21, %18, %cst_30 {dimension_numbers = #tpu.dot_dimension_numbers<[1], [0], [0], [1], [0, 0, 1, 1], [], []>} : vector<8x32xf32>, vector<32x64xf32>, vector<8x64xf32> -> vector<8x64xf32>
    %cst_31 = arith.constant dense<0xFF800000> : vector<8xf32>
    %23 = vector.multi_reduction <maximumf>, %22, %cst_31 [1] : vector<8x64xf32> to vector<8xf32>
    %24 = vector.shape_cast %23 : vector<8xf32> to vector<8x1xf32>
    %25 = vector.broadcast %24 : vector<8x1xf32> to vector<8x64xf32>
    %26 = arith.subf %22, %25 : vector<8x64xf32>
    %27 = math.exp %26 : vector<8x64xf32>
    %cst_32 = arith.constant dense<0.000000e+00> : vector<8xf32>
    %28 = vector.multi_reduction <add>, %27, %cst_32 [1] : vector<8x64xf32> to vector<8xf32>
    %29 = vector.shape_cast %28 : vector<8xf32> to vector<8x1xf32>
    %30 = tpu.reciprocal %29 {approx = true} : vector<8x1xf32> -> vector<8x1xf32>
    %31 = vector.broadcast %30 : vector<8x1xf32> to vector<8x64xf32>
    %32 = arith.mulf %27, %31 : vector<8x64xf32>
    %cst_33 = arith.constant dense<0.000000e+00> : vector<8x32xf32>
    %33 = tpu.matmul %32, %18, %cst_33 {dimension_numbers = #tpu.dot_dimension_numbers<[1], [1], [0], [0], [0, 0, 1, 0], [], []>} : vector<8x64xf32>, vector<32x64xf32>, vector<8x32xf32> -> vector<8x32xf32>
    %34 = arith.addf %33, %21 : vector<8x32xf32>
    %cst_34 = arith.constant dense<0.000000e+00> : vector<8xf32>
    %35 = vector.multi_reduction <add>, %34, %cst_34 [1] : vector<8x32xf32> to vector<8xf32>
    %36 = vector.shape_cast %35 : vector<8xf32> to vector<8x1xf32>
    %cst_35 = arith.constant 3.200000e+01 : f32
    %37 = vector.broadcast %cst_35 : f32 to vector<8x1xf32>
    %38 = arith.divf %36, %37 : vector<8x1xf32>
    %39 = vector.broadcast %38 : vector<8x1xf32> to vector<8x32xf32>
    %40 = arith.subf %34, %39 : vector<8x32xf32>
    %41 = arith.mulf %40, %40 : vector<8x32xf32>
    %cst_36 = arith.constant dense<0.000000e+00> : vector<8xf32>
    %42 = vector.multi_reduction <add>, %41, %cst_36 [1] : vector<8x32xf32> to vector<8xf32>
    %43 = vector.shape_cast %42 : vector<8xf32> to vector<8x1xf32>
    %cst_37 = arith.constant 3.200000e+01 : f32
    %44 = vector.broadcast %cst_37 : f32 to vector<8x1xf32>
    %45 = arith.divf %43, %44 : vector<8x1xf32>
    %46 = vector.broadcast %38 : vector<8x1xf32> to vector<8x32xf32>
    %47 = arith.subf %34, %46 : vector<8x32xf32>
    %cst_38 = arith.constant 9.99999974E-6 : f32
    %48 = vector.broadcast %cst_38 : f32 to vector<8x1xf32>
    %49 = arith.addf %45, %48 : vector<8x1xf32>
    %50 = math.rsqrt %49 : vector<8x1xf32>
    %51 = vector.broadcast %50 : vector<8x1xf32> to vector<8x32xf32>
    %52 = arith.mulf %47, %51 : vector<8x32xf32>
    %53 = vector.broadcast %8 : vector<1x32xf32> to vector<8x32xf32>
    %54 = arith.mulf %52, %53 : vector<8x32xf32>
    %55 = vector.broadcast %9 : vector<1x32xf32> to vector<8x32xf32>
    %56 = arith.addf %54, %55 : vector<8x32xf32>
    %cst_39 = arith.constant dense<0.000000e+00> : vector<8x32xf32>
    %57 = tpu.matmul %56, %4, %cst_39 {dimension_numbers = #tpu.dot_dimension_numbers<[1], [0], [0], [1], [0, 0, 1, 1], [], []>} : vector<8x32xf32>, vector<32x32xf32>, vector<8x32xf32> -> vector<8x32xf32>
    %58 = vector.broadcast %5 : vector<1x32xf32> to vector<8x32xf32>
    %59 = arith.addf %57, %58 : vector<8x32xf32>
    %cst_40 = arith.constant 0.000000e+00 : f32
    %60 = vector.broadcast %cst_40 : f32 to vector<8x32xf32>
    %61 = arith.maximumf %59, %60 : vector<8x32xf32>
    %cst_41 = arith.constant dense<0.000000e+00> : vector<8x32xf32>
    %62 = tpu.matmul %61, %6, %cst_41 {dimension_numbers = #tpu.dot_dimension_numbers<[1], [0], [0], [1], [0, 0, 1, 1], [], []>} : vector<8x32xf32>, vector<32x32xf32>, vector<8x32xf32> -> vector<8x32xf32>
    %63 = vector.broadcast %7 : vector<1x32xf32> to vector<8x32xf32>
    %64 = arith.addf %62, %63 : vector<8x32xf32>
    %65 = arith.addf %56, %64 : vector<8x32xf32>
    %cst_42 = arith.constant dense<0.000000e+00> : vector<8xf32>
    %66 = vector.multi_reduction <add>, %65, %cst_42 [1] : vector<8x32xf32> to vector<8xf32>
    %67 = vector.shape_cast %66 : vector<8xf32> to vector<8x1xf32>
    %cst_43 = arith.constant 3.200000e+01 : f32
    %68 = vector.broadcast %cst_43 : f32 to vector<8x1xf32>
    %69 = arith.divf %67, %68 : vector<8x1xf32>
    %70 = vector.broadcast %69 : vector<8x1xf32> to vector<8x32xf32>
    %71 = arith.subf %65, %70 : vector<8x32xf32>
    %72 = arith.mulf %71, %71 : vector<8x32xf32>
    %cst_44 = arith.constant dense<0.000000e+00> : vector<8xf32>
    %73 = vector.multi_reduction <add>, %72, %cst_44 [1] : vector<8x32xf32> to vector<8xf32>
    %74 = vector.shape_cast %73 : vector<8xf32> to vector<8x1xf32>
    %cst_45 = arith.constant 3.200000e+01 : f32
    %75 = vector.broadcast %cst_45 : f32 to vector<8x1xf32>
    %76 = arith.divf %74, %75 : vector<8x1xf32>
    %77 = vector.broadcast %69 : vector<8x1xf32> to vector<8x32xf32>
    %78 = arith.subf %65, %77 : vector<8x32xf32>
    %cst_46 = arith.constant 9.99999974E-6 : f32
    %79 = vector.broadcast %cst_46 : f32 to vector<8x1xf32>
    %80 = arith.addf %76, %79 : vector<8x1xf32>
    %81 = math.rsqrt %80 : vector<8x1xf32>
    %82 = vector.broadcast %81 : vector<8x1xf32> to vector<8x32xf32>
    %83 = arith.mulf %78, %82 : vector<8x32xf32>
    %84 = vector.broadcast %10 : vector<1x32xf32> to vector<8x32xf32>
    %85 = arith.mulf %83, %84 : vector<8x32xf32>
    %86 = vector.broadcast %11 : vector<1x32xf32> to vector<8x32xf32>
    %87 = arith.addf %85, %86 : vector<8x32xf32>
    %c0_47 = arith.constant 0 : index
    %c0_48 = arith.constant 0 : index
    %c0_49 = arith.constant 0 : index
    %88 = vector.load %arg15[%c0_47, %c0_48, %c0_49] : memref<2x8x32xf32, #tpu.memory_space<vmem>>, vector<1x8x32xf32>
    %89 = vector.shape_cast %88 : vector<1x8x32xf32> to vector<8x32xf32>
    %90 = vector.shape_cast %87 : vector<8x32xf32> to vector<1x8x32xf32>
    tpu.vector_store %arg15[%c0_47, %c0_48, %c0_49], %90 {strides = array<i32>} : memref<2x8x32xf32, #tpu.memory_space<vmem>>, vector<1x8x32xf32>,
    %c1 = arith.constant 1 : index
    %c0_50 = arith.constant 0 : index
    %c0_51 = arith.constant 0 : index
    %91 = vector.load %arg2[%c1, %c0_50, %c0_51] : memref<2x768x64xbf16, #tpu.memory_space<vmem>>, vector<1x768x64xbf16>
    %92 = vector.shape_cast %91 : vector<1x768x64xbf16> to vector<768x64xbf16>
    %c1_52 = arith.constant 1 : index
    %c0_53 = arith.constant 0 : index
    %c0_54 = arith.constant 0 : index
    %93 = vector.load %arg1[%c1_52, %c0_53, %c0_54] : memref<2x8x32xbf16, #tpu.memory_space<vmem>>, vector<1x8x32xbf16>
    %94 = vector.shape_cast %93 : vector<1x8x32xbf16> to vector<8x32xbf16>
    %cst_55 = arith.constant dense<0.000000e+00> : vector<32x64xf32>
    %95 = tpu.matmul %0, %92, %cst_55 {dimension_numbers = #tpu.dot_dimension_numbers<[1], [0], [0], [1], [0, 0, 1, 1], [], []>} : vector<32x768xbf16>, vector<768x64xbf16>, vector<32x64xf32> -> vector<32x64xf32>
    %96 = vector.broadcast %1 : vector<32x1xf32> to vector<32x64xf32>
    %97 = arith.addf %95, %96 : vector<32x64xf32>
    %cst_56 = arith.constant dense<0.000000e+00> : vector<8x32xf32>
    %98 = tpu.matmul %94, %2, %cst_56 {dimension_numbers = #tpu.dot_dimension_numbers<[1], [0], [0], [1], [0, 0, 1, 1], [], []>} : vector<8x32xbf16>, vector<32x32xbf16>, vector<8x32xf32> -> vector<8x32xf32>
    %99 = vector.broadcast %3 : vector<1x32xf32> to vector<8x32xf32>
    %100 = arith.addf %98, %99 : vector<8x32xf32>
    %cst_57 = arith.constant dense<0.000000e+00> : vector<8x64xf32>
    %101 = tpu.matmul %100, %97, %cst_57 {dimension_numbers = #tpu.dot_dimension_numbers<[1], [0], [0], [1], [0, 0, 1, 1], [], []>} : vector<8x32xf32>, vector<32x64xf32>, vector<8x64xf32> -> vector<8x64xf32>
    %cst_58 = arith.constant dense<0xFF800000> : vector<8xf32>
    %102 = vector.multi_reduction <maximumf>, %101, %cst_58 [1] : vector<8x64xf32> to vector<8xf32>
    %103 = vector.shape_cast %102 : vector<8xf32> to vector<8x1xf32>
    %104 = vector.broadcast %103 : vector<8x1xf32> to vector<8x64xf32>
    %105 = arith.subf %101, %104 : vector<8x64xf32>
    %106 = math.exp %105 : vector<8x64xf32>
    %cst_59 = arith.constant dense<0.000000e+00> : vector<8xf32>
    %107 = vector.multi_reduction <add>, %106, %cst_59 [1] : vector<8x64xf32> to vector<8xf32>
    %108 = vector.shape_cast %107 : vector<8xf32> to vector<8x1xf32>
    %109 = tpu.reciprocal %108 {approx = true} : vector<8x1xf32> -> vector<8x1xf32>
    %110 = vector.broadcast %109 : vector<8x1xf32> to vector<8x64xf32>
    %111 = arith.mulf %106, %110 : vector<8x64xf32>
    %cst_60 = arith.constant dense<0.000000e+00> : vector<8x32xf32>
    %112 = tpu.matmul %111, %97, %cst_60 {dimension_numbers = #tpu.dot_dimension_numbers<[1], [1], [0], [0], [0, 0, 1, 0], [], []>} : vector<8x64xf32>, vector<32x64xf32>, vector<8x32xf32> -> vector<8x32xf32>
    %113 = arith.addf %112, %100 : vector<8x32xf32>
    %cst_61 = arith.constant dense<0.000000e+00> : vector<8xf32>
    %114 = vector.multi_reduction <add>, %113, %cst_61 [1] : vector<8x32xf32> to vector<8xf32>
    %115 = vector.shape_cast %114 : vector<8xf32> to vector<8x1xf32>
    %cst_62 = arith.constant 3.200000e+01 : f32
    %116 = vector.broadcast %cst_62 : f32 to vector<8x1xf32>
    %117 = arith.divf %115, %116 : vector<8x1xf32>
    %118 = vector.broadcast %117 : vector<8x1xf32> to vector<8x32xf32>
    %119 = arith.subf %113, %118 : vector<8x32xf32>
    %120 = arith.mulf %119, %119 : vector<8x32xf32>
    %cst_63 = arith.constant dense<0.000000e+00> : vector<8xf32>
    %121 = vector.multi_reduction <add>, %120, %cst_63 [1] : vector<8x32xf32> to vector<8xf32>
    %122 = vector.shape_cast %121 : vector<8xf32> to vector<8x1xf32>
    %cst_64 = arith.constant 3.200000e+01 : f32
    %123 = vector.broadcast %cst_64 : f32 to vector<8x1xf32>
    %124 = arith.divf %122, %123 : vector<8x1xf32>
    %125 = vector.broadcast %117 : vector<8x1xf32> to vector<8x32xf32>
    %126 = arith.subf %113, %125 : vector<8x32xf32>
    %cst_65 = arith.constant 9.99999974E-6 : f32
    %127 = vector.broadcast %cst_65 : f32 to vector<8x1xf32>
    %128 = arith.addf %124, %127 : vector<8x1xf32>
    %129 = math.rsqrt %128 : vector<8x1xf32>
    %130 = vector.broadcast %129 : vector<8x1xf32> to vector<8x32xf32>
    %131 = arith.mulf %126, %130 : vector<8x32xf32>
    %132 = vector.broadcast %8 : vector<1x32xf32> to vector<8x32xf32>
    %133 = arith.mulf %131, %132 : vector<8x32xf32>
    %134 = vector.broadcast %9 : vector<1x32xf32> to vector<8x32xf32>
    %135 = arith.addf %133, %134 : vector<8x32xf32>
    %cst_66 = arith.constant dense<0.000000e+00> : vector<8x32xf32>
    %136 = tpu.matmul %135, %4, %cst_66 {dimension_numbers = #tpu.dot_dimension_numbers<[1], [0], [0], [1], [0, 0, 1, 1], [], []>} : vector<8x32xf32>, vector<32x32xf32>, vector<8x32xf32> -> vector<8x32xf32>
    %137 = vector.broadcast %5 : vector<1x32xf32> to vector<8x32xf32>
    %138 = arith.addf %136, %137 : vector<8x32xf32>
    %cst_67 = arith.constant 0.000000e+00 : f32
    %139 = vector.broadcast %cst_67 : f32 to vector<8x32xf32>
    %140 = arith.maximumf %138, %139 : vector<8x32xf32>
    %cst_68 = arith.constant dense<0.000000e+00> : vector<8x32xf32>
    %141 = tpu.matmul %140, %6, %cst_68 {dimension_numbers = #tpu.dot_dimension_numbers<[1], [0], [0], [1], [0, 0, 1, 1], [], []>} : vector<8x32xf32>, vector<32x32xf32>, vector<8x32xf32> -> vector<8x32xf32>
    %142 = vector.broadcast %7 : vector<1x32xf32> to vector<8x32xf32>
    %143 = arith.addf %141, %142 : vector<8x32xf32>
    %144 = arith.addf %135, %143 : vector<8x32xf32>
    %cst_69 = arith.constant dense<0.000000e+00> : vector<8xf32>
    %145 = vector.multi_reduction <add>, %144, %cst_69 [1] : vector<8x32xf32> to vector<8xf32>
    %146 = vector.shape_cast %145 : vector<8xf32> to vector<8x1xf32>
    %cst_70 = arith.constant 3.200000e+01 : f32
    %147 = vector.broadcast %cst_70 : f32 to vector<8x1xf32>
    %148 = arith.divf %146, %147 : vector<8x1xf32>
    %149 = vector.broadcast %148 : vector<8x1xf32> to vector<8x32xf32>
    %150 = arith.subf %144, %149 : vector<8x32xf32>
    %151 = arith.mulf %150, %150 : vector<8x32xf32>
    %cst_71 = arith.constant dense<0.000000e+00> : vector<8xf32>
    %152 = vector.multi_reduction <add>, %151, %cst_71 [1] : vector<8x32xf32> to vector<8xf32>
    %153 = vector.shape_cast %152 : vector<8xf32> to vector<8x1xf32>
    %cst_72 = arith.constant 3.200000e+01 : f32
    %154 = vector.broadcast %cst_72 : f32 to vector<8x1xf32>
    %155 = arith.divf %153, %154 : vector<8x1xf32>
    %156 = vector.broadcast %148 : vector<8x1xf32> to vector<8x32xf32>
    %157 = arith.subf %144, %156 : vector<8x32xf32>
    %cst_73 = arith.constant 9.99999974E-6 : f32
    %158 = vector.broadcast %cst_73 : f32 to vector<8x1xf32>
    %159 = arith.addf %155, %158 : vector<8x1xf32>
    %160 = math.rsqrt %159 : vector<8x1xf32>
    %161 = vector.broadcast %160 : vector<8x1xf32> to vector<8x32xf32>
    %162 = arith.mulf %157, %161 : vector<8x32xf32>
    %163 = vector.broadcast %10 : vector<1x32xf32> to vector<8x32xf32>
    %164 = arith.mulf %162, %163 : vector<8x32xf32>
    %165 = vector.broadcast %11 : vector<1x32xf32> to vector<8x32xf32>
    %166 = arith.addf %164, %165 : vector<8x32xf32>
    %c1_74 = arith.constant 1 : index
    %c0_75 = arith.constant 0 : index
    %c0_76 = arith.constant 0 : index
    %167 = vector.load %arg15[%c1_74, %c0_75, %c0_76] : memref<2x8x32xf32, #tpu.memory_space<vmem>>, vector<1x8x32xf32>
    %168 = vector.shape_cast %167 : vector<1x8x32xf32> to vector<8x32xf32>
    %169 = vector.shape_cast %166 : vector<8x32xf32> to vector<1x8x32xf32>
    tpu.vector_store %arg15[%c1_74, %c0_75, %c0_76], %169 {strides = array<i32>} : memref<2x8x32xf32, #tpu.memory_space<vmem>>, vector<1x8x32xf32>,
    return
  }
  func.func @transform_0(%arg0: i32) -> (i32, i32, i32) {
    %c0_i32 = arith.constant 0 : i32
    %c0_i32_0 = arith.constant 0 : i32
    %c0_i32_1 = arith.constant 0 : i32
    return %arg0, %c0_i32, %c0_i32_0 : i32, i32, i32
  }
  func.func @transform_1(%arg0: i32) -> (i32, i32, i32) {
    %c0_i32 = arith.constant 0 : i32
    %c0_i32_0 = arith.constant 0 : i32
    %c0_i32_1 = arith.constant 0 : i32
    return %arg0, %c0_i32, %c0_i32_0 : i32, i32, i32
  }
  func.func @transform_2(%arg0: i32) -> (i32, i32) {
    %c0_i32 = arith.constant 0 : i32
    %c0_i32_0 = arith.constant 0 : i32
    %c0_i32_1 = arith.constant 0 : i32
    return %c0_i32, %c0_i32_0 : i32, i32
  }
  func.func @transform_3(%arg0: i32) -> (i32, i32) {
    %c0_i32 = arith.constant 0 : i32
    %c0_i32_0 = arith.constant 0 : i32
    %c0_i32_1 = arith.constant 0 : i32
    return %c0_i32, %c0_i32_0 : i32, i32
  }
  func.func @transform_4(%arg0: i32) -> (i32, i32) {
    %c0_i32 = arith.constant 0 : i32
    %c0_i32_0 = arith.constant 0 : i32
    %c0_i32_1 = arith.constant 0 : i32
    return %c0_i32, %c0_i32_0 : i32, i32
  }
  func.func @transform_5(%arg0: i32) -> (i32, i32) {
    %c0_i32 = arith.constant 0 : i32
    %c0_i32_0 = arith.constant 0 : i32
    %c0_i32_1 = arith.constant 0 : i32
    return %c0_i32, %c0_i32_0 : i32, i32
  }
  func.func @transform_6(%arg0: i32) -> (i32, i32) {
    %c0_i32 = arith.constant 0 : i32
    %c0_i32_0 = arith.constant 0 : i32
    %c0_i32_1 = arith.constant 0 : i32
    return %c0_i32, %c0_i32_0 : i32, i32
  }
  func.func @transform_7(%arg0: i32) -> (i32, i32) {
    %c0_i32 = arith.constant 0 : i32
    %c0_i32_0 = arith.constant 0 : i32
    %c0_i32_1 = arith.constant 0 : i32
    return %c0_i32, %c0_i32_0 : i32, i32
  }
  func.func @transform_8(%arg0: i32) -> (i32, i32) {
    %c0_i32 = arith.constant 0 : i32
    %c0_i32_0 = arith.constant 0 : i32
    %c0_i32_1 = arith.constant 0 : i32
    return %c0_i32, %c0_i32_0 : i32, i32
  }
  func.func @transform_9(%arg0: i32) -> (i32, i32) {
    %c0_i32 = arith.constant 0 : i32
    %c0_i32_0 = arith.constant 0 : i32
    %c0_i32_1 = arith.constant 0 : i32
    return %c0_i32, %c0_i32_0 : i32, i32
  }
  func.func @transform_10(%arg0: i32) -> (i32, i32) {
    %c0_i32 = arith.constant 0 : i32
    %c0_i32_0 = arith.constant 0 : i32
    %c0_i32_1 = arith.constant 0 : i32
    return %c0_i32, %c0_i32_0 : i32, i32
  }
  func.func @transform_11(%arg0: i32) -> (i32, i32) {
    %c0_i32 = arith.constant 0 : i32
    %c0_i32_0 = arith.constant 0 : i32
    %c0_i32_1 = arith.constant 0 : i32
    return %c0_i32, %c0_i32_0 : i32, i32
  }
  func.func @transform_12(%arg0: i32) -> (i32, i32) {
    %c0_i32 = arith.constant 0 : i32
    %c0_i32_0 = arith.constant 0 : i32
    %c0_i32_1 = arith.constant 0 : i32
    return %c0_i32, %c0_i32_0 : i32, i32
  }
  func.func @transform_13(%arg0: i32) -> (i32, i32) {
    %c0_i32 = arith.constant 0 : i32
    %c0_i32_0 = arith.constant 0 : i32
    %c0_i32_1 = arith.constant 0 : i32
    return %c0_i32, %c0_i32_0 : i32, i32
  }
  func.func @transform_14(%arg0: i32) -> (i32, i32, i32) {
    %c0_i32 = arith.constant 0 : i32
    %c0_i32_0 = arith.constant 0 : i32
    %c0_i32_1 = arith.constant 0 : i32
    return %arg0, %c0_i32, %c0_i32_0 : i32, i32, i32
  }
}

</mosaic_0001>

<llo_original>
// kernel: tpu_custom_call.1
$region0: #{tpu_custom_call.1}
  #allocation0 [shape = 'u32[]', space=smem, size = 0x4, offset = 0x4, fixed_abs, tag = 'smem constant byte address 0x4 - core index']
  #allocation1 [shape = 'u32[144,128]{1,0:T(1,128)}', space=vmem, size = 0x12000, scoped, tag = 'internal scratch']
  %s0 = inlined_call_operand.vmem [shape: bf16[4,8,32], index: 0, kind: input, shape index: {}]
  %s1 = inlined_call_operand.vmem [shape: bf16[4,768,64], index: 1, kind: input, shape index: {}]
  %s2 = inlined_call_operand.vmem [shape: bf16[32,768], index: 2, kind: input, shape index: {}]
  %s3 = inlined_call_operand.vmem [shape: f32[32,1], index: 3, kind: input, shape index: {}]
  %s4 = inlined_call_operand.vmem [shape: bf16[32,32], index: 4, kind: input, shape index: {}]
  %s5 = inlined_call_operand.vmem [shape: f32[1,32], index: 5, kind: input, shape index: {}]
  %s6 = inlined_call_operand.vmem [shape: f32[1,32], index: 6, kind: input, shape index: {}]
  %s7 = inlined_call_operand.vmem [shape: f32[1,32], index: 7, kind: input, shape index: {}]
  %s8 = inlined_call_operand.vmem [shape: f32[32,32], index: 8, kind: input, shape index: {}]
  %s9 = inlined_call_operand.vmem [shape: f32[1,32], index: 9, kind: input, shape index: {}]
  %s10 = inlined_call_operand.vmem [shape: f32[32,32], index: 10, kind: input, shape index: {}]
  %s11 = inlined_call_operand.vmem [shape: f32[1,32], index: 11, kind: input, shape index: {}]
  %s12 = inlined_call_operand.vmem [shape: f32[1,32], index: 12, kind: input, shape index: {}]
  %s13 = inlined_call_operand.vmem [shape: f32[1,32], index: 13, kind: input, shape index: {}]
  %s14 = inlined_call_operand.hbm [shape: f32[4,8,32], index: 14, kind: output, shape index: {}]
  %s15 = sld [smem:[#allocation0]]
  $region89: #{tpu_custom_call.1} parent=0
    _
  %s17 = ssub.s32 1, %s15
  %s18 = scalar_select 0, %s17, %s15
  $region1: #{tpu_custom_call.1} parent=0
    #allocation2 [shape = 'u8[16384]{0}', space=vmem, size = 0x4000, scoped, tag = 'output window, operand 0']
    #allocation3 [shape = 's32[2]{0}', space=sflag, size = 0x8, scoped, tag = 'scoped memory for tpu_custom_call.1']
    %19 = vsyncpa [#allocation3], 0
    %s20 = scalar_lea.sflag [#allocation3], 1
    %21 = vsyncpa %s20, 0
    loop: start=0, step=1, limit=4
    $region2: #{tpu_custom_call.1} parent=1 // loop_pre_header
      _
    $region3: #{tpu_custom_call.1} parent=1 // loop_header
      %s23 = sphi 0, %s27
      %p24 = scmp.ge.s32.totalorder %s23, 4
      %s33 = sphi 0, %s35
      %s36 = sphi 0, %s33
      %s37 = sphi 0, %s36
      %s53 = sphi 0, %s37
      %s59 = sphi 0, %s61
      %s62 = sphi 0, %s59
      %s63 = sphi 0, %s62
      %s79 = sphi 0, %s63
      %s83 = sphi 0, %s83
      %s85 = sphi 0, %s83
      %s86 = sphi 0, %s85
      %s100 = sphi 0, %s86
      %s104 = sphi 0, %s104
      %s106 = sphi 0, %s104
      %s107 = sphi 0, %s106
      %s121 = sphi 0, %s107
      %s125 = sphi 0, %s125
      %s127 = sphi 0, %s125
      %s128 = sphi 0, %s127
      %s142 = sphi 0, %s128
      %s146 = sphi 0, %s146
      %s148 = sphi 0, %s146
      %s149 = sphi 0, %s148
      %s163 = sphi 0, %s149
      %s167 = sphi 0, %s167
      %s169 = sphi 0, %s167
      %s170 = sphi 0, %s169
      %s184 = sphi 0, %s170
      %s188 = sphi 0, %s188
      %s190 = sphi 0, %s188
      %s191 = sphi 0, %s190
      %s205 = sphi 0, %s191
      %s209 = sphi 0, %s209
      %s211 = sphi 0, %s209
      %s212 = sphi 0, %s211
      %s226 = sphi 0, %s212
      %s230 = sphi 0, %s230
      %s232 = sphi 0, %s230
      %s233 = sphi 0, %s232
      %s247 = sphi 0, %s233
      %s251 = sphi 0, %s251
      %s253 = sphi 0, %s251
      %s254 = sphi 0, %s253
      %s268 = sphi 0, %s254
      %s272 = sphi 0, %s272
      %s274 = sphi 0, %s272
      %s275 = sphi 0, %s274
      %s289 = sphi 0, %s275
      %s293 = sphi 0, %s293
      %s295 = sphi 0, %s293
      %s296 = sphi 0, %s295
      %s310 = sphi 0, %s296
      %s314 = sphi 0, %s314
      %s316 = sphi 0, %s314
      %s317 = sphi 0, %s316
      %s331 = sphi 0, %s317
      %s337 = sphi 0, %s339
      %s340 = sphi 0, %s337
      %s341 = sphi 0, %s340
      %s357 = sphi 0, %s341
    $region4: #{tpu_custom_call.1} parent=1 // loop_header_branch
      %26 = sbr.rel (%p24) target = $region8
    $region5: #{tpu_custom_call.1} parent=1 // loop_body
      %s28 = ssub.s32 %s23, 1
      %s29 = ssub.s32 %s23, 2
      %s30 = sadd.s32 %s23, 1
      %s31 = ssub.s32 %s23, %s30
      %p32 = scmp.eq.s32.totalorder %s31, 0
      %s34 = sadd.s32 %s33, 1
      %s35 = scalar_select %p32, %s33, %s34
      %p38 = pneg %p32
      %p39 = scmp.eq.s32.totalorder %s23, 1
      %p40 = por %p38, %p39
      %p41 = scmp.ne.s32.totalorder %s33, %s36
      %p42 = scmp.eq.s32.totalorder %s23, 0
      %p43 = por %p41, %p42
      %p44 = scmp.ne.s32.totalorder %s33, %s36
      %p45 = scmp.eq.s32.totalorder %s28, 1
      %p46 = por %p44, %p45
      %p47 = scmp.ne.s32.totalorder %s36, %s37
      %p48 = scmp.eq.s32.totalorder %s28, 0
      %p49 = por %p47, %p48
      %p50 = scmp.ne.s32.totalorder %s36, %s37
      %p51 = scmp.eq.s32.totalorder %s29, 1
      %p52 = por %p50, %p51
      %p54 = scmp.ne.s32.totalorder %s37, %s53
      %p55 = scmp.eq.s32.totalorder %s29, 0
      %p56 = por %p54, %p55
      %s57 = ssub.s32 %s23, %s30
      %p58 = scmp.eq.s32.totalorder %s57, 0
      %s60 = sadd.s32 %s59, 1
      %s61 = scalar_select %p58, %s59, %s60
      %p64 = pneg %p58
      %p65 = scmp.eq.s32.totalorder %s23, 1
      %p66 = por %p64, %p65
      %p67 = scmp.ne.s32.totalorder %s59, %s62
      %p68 = scmp.eq.s32.totalorder %s23, 0
      %p69 = por %p67, %p68
      %p70 = scmp.ne.s32.totalorder %s59, %s62
      %p71 = scmp.eq.s32.totalorder %s28, 1
      %p72 = por %p70, %p71
      %p73 = scmp.ne.s32.totalorder %s62, %s63
      %p74 = scmp.eq.s32.totalorder %s28, 0
      %p75 = por %p73, %p74
      %p76 = scmp.ne.s32.totalorder %s62, %s63
      %p77 = scmp.eq.s32.totalorder %s29, 1
      %p78 = por %p76, %p77
      %p80 = scmp.ne.s32.totalorder %s63, %s79
      %p81 = scmp.eq.s32.totalorder %s29, 0
      %p82 = por %p80, %p81
      %s84 = sadd.s32 %s83, 1
      %p87 = scmp.eq.s32.totalorder %s23, 1
      %p88 = scmp.ne.s32.totalorder %s83, %s85
      %p89 = scmp.eq.s32.totalorder %s23, 0
      %p90 = por %p88, %p89
      %p91 = scmp.ne.s32.totalorder %s83, %s85
      %p92 = scmp.eq.s32.totalorder %s28, 1
      %p93 = por %p91, %p92
      %p94 = scmp.ne.s32.totalorder %s85, %s86
      %p95 = scmp.eq.s32.totalorder %s28, 0
      %p96 = por %p94, %p95
      %p97 = scmp.ne.s32.totalorder %s85, %s86
      %p98 = scmp.eq.s32.totalorder %s29, 1
      %p99 = por %p97, %p98
      %p101 = scmp.ne.s32.totalorder %s86, %s100
      %p102 = scmp.eq.s32.totalorder %s29, 0
      %p103 = por %p101, %p102
      %s105 = sadd.s32 %s104, 1
      %p108 = scmp.eq.s32.totalorder %s23, 1
      %p109 = scmp.ne.s32.totalorder %s104, %s106
      %p110 = scmp.eq.s32.totalorder %s23, 0
      %p111 = por %p109, %p110
      %p112 = scmp.ne.s32.totalorder %s104, %s106
      %p113 = scmp.eq.s32.totalorder %s28, 1
      %p114 = por %p112, %p113
      %p115 = scmp.ne.s32.totalorder %s106, %s107
      %p116 = scmp.eq.s32.totalorder %s28, 0
      %p117 = por %p115, %p116
      %p118 = scmp.ne.s32.totalorder %s106, %s107
      %p119 = scmp.eq.s32.totalorder %s29, 1
      %p120 = por %p118, %p119
      %p122 = scmp.ne.s32.totalorder %s107, %s121
      %p123 = scmp.eq.s32.totalorder %s29, 0
      %p124 = por %p122, %p123
      %s126 = sadd.s32 %s125, 1
      %p129 = scmp.eq.s32.totalorder %s23, 1
      %p130 = scmp.ne.s32.totalorder %s125, %s127
      %p131 = scmp.eq.s32.totalorder %s23, 0
      %p132 = por %p130, %p131
      %p133 = scmp.ne.s32.totalorder %s125, %s127
      %p134 = scmp.eq.s32.totalorder %s28, 1
      %p135 = por %p133, %p134
      %p136 = scmp.ne.s32.totalorder %s127, %s128
      %p137 = scmp.eq.s32.totalorder %s28, 0
      %p138 = por %p136, %p137
      %p139 = scmp.ne.s32.totalorder %s127, %s128
      %p140 = scmp.eq.s32.totalorder %s29, 1
      %p141 = por %p139, %p140
      %p143 = scmp.ne.s32.totalorder %s128, %s142
      %p144 = scmp.eq.s32.totalorder %s29, 0
      %p145 = por %p143, %p144
      %s147 = sadd.s32 %s146, 1
      %p150 = scmp.eq.s32.totalorder %s23, 1
      %p151 = scmp.ne.s32.totalorder %s146, %s148
      %p152 = scmp.eq.s32.totalorder %s23, 0
      %p153 = por %p151, %p152
      %p154 = scmp.ne.s32.totalorder %s146, %s148
      %p155 = scmp.eq.s32.totalorder %s28, 1
      %p156 = por %p154, %p155
      %p157 = scmp.ne.s32.totalorder %s148, %s149
      %p158 = scmp.eq.s32.totalorder %s28, 0
      %p159 = por %p157, %p158
      %p160 = scmp.ne.s32.totalorder %s148, %s149
      %p161 = scmp.eq.s32.totalorder %s29, 1
      %p162 = por %p160, %p161
      %p164 = scmp.ne.s32.totalorder %s149, %s163
      %p165 = scmp.eq.s32.totalorder %s29, 0
      %p166 = por %p164, %p165
      %s168 = sadd.s32 %s167, 1
      %p171 = scmp.eq.s32.totalorder %s23, 1
      %p172 = scmp.ne.s32.totalorder %s167, %s169
      %p173 = scmp.eq.s32.totalorder %s23, 0
      %p174 = por %p172, %p173
      %p175 = scmp.ne.s32.totalorder %s167, %s169
      %p176 = scmp.eq.s32.totalorder %s28, 1
      %p177 = por %p175, %p176
      %p178 = scmp.ne.s32.totalorder %s169, %s170
      %p179 = scmp.eq.s32.totalorder %s28, 0
      %p180 = por %p178, %p179
      %p181 = scmp.ne.s32.totalorder %s169, %s170
      %p182 = scmp.eq.s32.totalorder %s29, 1
      %p183 = por %p181, %p182
      %p185 = scmp.ne.s32.totalorder %s170, %s184
      %p186 = scmp.eq.s32.totalorder %s29, 0
      %p187 = por %p185, %p186
      %s189 = sadd.s32 %s188, 1
      %p192 = scmp.eq.s32.totalorder %s23, 1
      %p193 = scmp.ne.s32.totalorder %s188, %s190
      %p194 = scmp.eq.s32.totalorder %s23, 0
      %p195 = por %p193, %p194
      %p196 = scmp.ne.s32.totalorder %s188, %s190
      %p197 = scmp.eq.s32.totalorder %s28, 1
      %p198 = por %p196, %p197
      %p199 = scmp.ne.s32.totalorder %s190, %s191
      %p200 = scmp.eq.s32.totalorder %s28, 0
      %p201 = por %p199, %p200
      %p202 = scmp.ne.s32.totalorder %s190, %s191
      %p203 = scmp.eq.s32.totalorder %s29, 1
      %p204 = por %p202, %p203
      %p206 = scmp.ne.s32.totalorder %s191, %s205
      %p207 = scmp.eq.s32.totalorder %s29, 0
      %p208 = por %p206, %p207
      %s210 = sadd.s32 %s209, 1
      %p213 = scmp.eq.s32.totalorder %s23, 1
      %p214 = scmp.ne.s32.totalorder %s209, %s211
      %p215 = scmp.eq.s32.totalorder %s23, 0
      %p216 = por %p214, %p215
      %p217 = scmp.ne.s32.totalorder %s209, %s211
      %p218 = scmp.eq.s32.totalorder %s28, 1
      %p219 = por %p217, %p218
      %p220 = scmp.ne.s32.totalorder %s211, %s212
      %p221 = scmp.eq.s32.totalorder %s28, 0
      %p222 = por %p220, %p221
      %p223 = scmp.ne.s32.totalorder %s211, %s212
      %p224 = scmp.eq.s32.totalorder %s29, 1
      %p225 = por %p223, %p224
      %p227 = scmp.ne.s32.totalorder %s212, %s226
      %p228 = scmp.eq.s32.totalorder %s29, 0
      %p229 = por %p227, %p228
      %s231 = sadd.s32 %s230, 1
      %p234 = scmp.eq.s32.totalorder %s23, 1
      %p235 = scmp.ne.s32.totalorder %s230, %s232
      %p236 = scmp.eq.s32.totalorder %s23, 0
      %p237 = por %p235, %p236
      %p238 = scmp.ne.s32.totalorder %s230, %s232
      %p239 = scmp.eq.s32.totalorder %s28, 1
      %p240 = por %p238, %p239
      %p241 = scmp.ne.s32.totalorder %s232, %s233
      %p242 = scmp.eq.s32.totalorder %s28, 0
      %p243 = por %p241, %p242
      %p244 = scmp.ne.s32.totalorder %s232, %s233
      %p245 = scmp.eq.s32.totalorder %s29, 1
      %p246 = por %p244, %p245
      %p248 = scmp.ne.s32.totalorder %s233, %s247
      %p249 = scmp.eq.s32.totalorder %s29, 0
      %p250 = por %p248, %p249
      %s252 = sadd.s32 %s251, 1
      %p255 = scmp.eq.s32.totalorder %s23, 1
      %p256 = scmp.ne.s32.totalorder %s251, %s253
      %p257 = scmp.eq.s32.totalorder %s23, 0
      %p258 = por %p256, %p257
      %p259 = scmp.ne.s32.totalorder %s251, %s253
      %p260 = scmp.eq.s32.totalorder %s28, 1
      %p261 = por %p259, %p260
      %p262 = scmp.ne.s32.totalorder %s253, %s254
      %p263 = scmp.eq.s32.totalorder %s28, 0
      %p264 = por %p262, %p263
      %p265 = scmp.ne.s32.totalorder %s253, %s254
      %p266 = scmp.eq.s32.totalorder %s29, 1
      %p267 = por %p265, %p266
      %p269 = scmp.ne.s32.totalorder %s254, %s268
      %p270 = scmp.eq.s32.totalorder %s29, 0
      %p271 = por %p269, %p270
      %s273 = sadd.s32 %s272, 1
      %p276 = scmp.eq.s32.totalorder %s23, 1
      %p277 = scmp.ne.s32.totalorder %s272, %s274
      %p278 = scmp.eq.s32.totalorder %s23, 0
      %p279 = por %p277, %p278
      %p280 = scmp.ne.s32.totalorder %s272, %s274
      %p281 = scmp.eq.s32.totalorder %s28, 1
      %p282 = por %p280, %p281
      %p283 = scmp.ne.s32.totalorder %s274, %s275
      %p284 = scmp.eq.s32.totalorder %s28, 0
      %p285 = por %p283, %p284
      %p286 = scmp.ne.s32.totalorder %s274, %s275
      %p287 = scmp.eq.s32.totalorder %s29, 1
      %p288 = por %p286, %p287
      %p290 = scmp.ne.s32.totalorder %s275, %s289
      %p291 = scmp.eq.s32.totalorder %s29, 0
      %p292 = por %p290, %p291
      %s294 = sadd.s32 %s293, 1
      %p297 = scmp.eq.s32.totalorder %s23, 1
      %p298 = scmp.ne.s32.totalorder %s293, %s295
      %p299 = scmp.eq.s32.totalorder %s23, 0
      %p300 = por %p298, %p299
      %p301 = scmp.ne.s32.totalorder %s293, %s295
      %p302 = scmp.eq.s32.totalorder %s28, 1
      %p303 = por %p301, %p302
      %p304 = scmp.ne.s32.totalorder %s295, %s296
      %p305 = scmp.eq.s32.totalorder %s28, 0
      %p306 = por %p304, %p305
      %p307 = scmp.ne.s32.totalorder %s295, %s296
      %p308 = scmp.eq.s32.totalorder %s29, 1
      %p309 = por %p307, %p308
      %p311 = scmp.ne.s32.totalorder %s296, %s310
      %p312 = scmp.eq.s32.totalorder %s29, 0
      %p313 = por %p311, %p312
      %s315 = sadd.s32 %s314, 1
      %p318 = scmp.eq.s32.totalorder %s23, 1
      %p319 = scmp.ne.s32.totalorder %s314, %s316
      %p320 = scmp.eq.s32.totalorder %s23, 0
      %p321 = por %p319, %p320
      %p322 = scmp.ne.s32.totalorder %s314, %s316
      %p323 = scmp.eq.s32.totalorder %s28, 1
      %p324 = por %p322, %p323
      %p325 = scmp.ne.s32.totalorder %s316, %s317
      %p326 = scmp.eq.s32.totalorder %s28, 0
      %p327 = por %p325, %p326
      %p328 = scmp.ne.s32.totalorder %s316, %s317
      %p329 = scmp.eq.s32.totalorder %s29, 1
      %p330 = por %p328, %p329
      %p332 = scmp.ne.s32.totalorder %s317, %s331
      %p333 = scmp.eq.s32.totalorder %s29, 0
      %p334 = por %p332, %p333
      %s335 = ssub.s32 %s23, %s30
      %p336 = scmp.eq.s32.totalorder %s335, 0
      %s338 = sadd.s32 %s337, 1
      %s339 = scalar_select %p336, %s337, %s338
      %p342 = pneg %p336
      %p343 = scmp.eq.s32.totalorder %s23, 1
      %p344 = por %p342, %p343
      %p345 = scmp.ne.s32.totalorder %s337, %s340
      %p346 = scmp.eq.s32.totalorder %s23, 0
      %p347 = por %p345, %p346
      %p348 = scmp.ne.s32.totalorder %s337, %s340
      %p349 = scmp.eq.s32.totalorder %s28, 1
      %p350 = por %p348, %p349
      %p351 = scmp.ne.s32.totalorder %s340, %s341
      %p352 = scmp.eq.s32.totalorder %s28, 0
      %p353 = por %p351, %p352
      %p354 = scmp.ne.s32.totalorder %s340, %s341
      %p355 = scmp.eq.s32.totalorder %s29, 1
      %p356 = por %p354, %p355
      %p358 = scmp.ne.s32.totalorder %s341, %s357
      %p359 = scmp.eq.s32.totalorder %s29, 0
      %p360 = por %p358, %p359
      %p361 = scmp.le.s32.totalorder 1, %s23
      %p362 = scmp.lt.s32.totalorder %s23, 3
      %p363 = pnand %p361, %p362
      %p364 = pneg %p363
      // Predicated region
      $region9: #{tpu_custom_call.1} parent=5 // pred_check
        _
      $region10: #{tpu_custom_call.1} parent=5 // pred_check_branch
        %366 = sbr.rel (%p363) target = $region12
      $region11: #{tpu_custom_call.1} parent=5 // pred_region
        %s367 = ssub.s32 %s23, 1
        // Predicated region
        $region13: #{tpu_custom_call.1} parent=11 // pred_check
          %p368 = pneg %p96
        $region14: #{tpu_custom_call.1} parent=11 // pred_check_branch
          %370 = sbr.rel (%p368) target = $region16
        $region15: #{tpu_custom_call.1} parent=11 // pred_region
          _
        $region16: #{tpu_custom_call.1} parent=11 // pred_fallthru
          _
        // Predicated region
        $region17: #{tpu_custom_call.1} parent=11 // pred_check
          %p371 = pneg %p117
        $region18: #{tpu_custom_call.1} parent=11 // pred_check_branch
          %373 = sbr.rel (%p371) target = $region20
        $region19: #{tpu_custom_call.1} parent=11 // pred_region
          _
        $region20: #{tpu_custom_call.1} parent=11 // pred_fallthru
          _
        // Predicated region
        $region21: #{tpu_custom_call.1} parent=11 // pred_check
          %p374 = pneg %p138
        $region22: #{tpu_custom_call.1} parent=11 // pred_check_branch
          %376 = sbr.rel (%p374) target = $region24
        $region23: #{tpu_custom_call.1} parent=11 // pred_region
          _
        $region24: #{tpu_custom_call.1} parent=11 // pred_fallthru
          _
        // Predicated region
        $region25: #{tpu_custom_call.1} parent=11 // pred_check
          %p377 = pneg %p159
        $region26: #{tpu_custom_call.1} parent=11 // pred_check_branch
          %379 = sbr.rel (%p377) target = $region28
        $region27: #{tpu_custom_call.1} parent=11 // pred_region
          _
        $region28: #{tpu_custom_call.1} parent=11 // pred_fallthru
          _
        // Predicated region
        $region29: #{tpu_custom_call.1} parent=11 // pred_check
          %p380 = pneg %p180
        $region30: #{tpu_custom_call.1} parent=11 // pred_check_branch
          %382 = sbr.rel (%p380) target = $region32
        $region31: #{tpu_custom_call.1} parent=11 // pred_region
          _
        $region32: #{tpu_custom_call.1} parent=11 // pred_fallthru
          _
        // Predicated region
        $region33: #{tpu_custom_call.1} parent=11 // pred_check
          %p383 = pneg %p201
        $region34: #{tpu_custom_call.1} parent=11 // pred_check_branch
          %385 = sbr.rel (%p383) target = $region36
        $region35: #{tpu_custom_call.1} parent=11 // pred_region
          _
        $region36: #{tpu_custom_call.1} parent=11 // pred_fallthru
          _
        // Predicated region
        $region37: #{tpu_custom_call.1} parent=11 // pred_check
          %p386 = pneg %p222
        $region38: #{tpu_custom_call.1} parent=11 // pred_check_branch
          %388 = sbr.rel (%p386) target = $region40
        $region39: #{tpu_custom_call.1} parent=11 // pred_region
          _
        $region40: #{tpu_custom_call.1} parent=11 // pred_fallthru
          _
        // Predicated region
        $region41: #{tpu_custom_call.1} parent=11 // pred_check
          %p389 = pneg %p243
        $region42: #{tpu_custom_call.1} parent=11 // pred_check_branch
          %391 = sbr.rel (%p389) target = $region44
        $region43: #{tpu_custom_call.1} parent=11 // pred_region
          _
        $region44: #{tpu_custom_call.1} parent=11 // pred_fallthru
          _
        // Predicated region
        $region45: #{tpu_custom_call.1} parent=11 // pred_check
          %p392 = pneg %p264
        $region46: #{tpu_custom_call.1} parent=11 // pred_check_branch
          %394 = sbr.rel (%p392) target = $region48
        $region47: #{tpu_custom_call.1} parent=11 // pred_region
          _
        $region48: #{tpu_custom_call.1} parent=11 // pred_fallthru
          _
        // Predicated region
        $region49: #{tpu_custom_call.1} parent=11 // pred_check
          %p395 = pneg %p285
        $region50: #{tpu_custom_call.1} parent=11 // pred_check_branch
          %397 = sbr.rel (%p395) target = $region52
        $region51: #{tpu_custom_call.1} parent=11 // pred_region
          _
        $region52: #{tpu_custom_call.1} parent=11 // pred_fallthru
          _
        // Predicated region
        $region53: #{tpu_custom_call.1} parent=11 // pred_check
          %p398 = pneg %p306
        $region54: #{tpu_custom_call.1} parent=11 // pred_check_branch
          %400 = sbr.rel (%p398) target = $region56
        $region55: #{tpu_custom_call.1} parent=11 // pred_region
          _
        $region56: #{tpu_custom_call.1} parent=11 // pred_fallthru
          _
        // Predicated region
        $region57: #{tpu_custom_call.1} parent=11 // pred_check
          %p401 = pneg %p327
        $region58: #{tpu_custom_call.1} parent=11 // pred_check_branch
          %403 = sbr.rel (%p401) target = $region60
        $region59: #{tpu_custom_call.1} parent=11 // pred_region
          _
        $region60: #{tpu_custom_call.1} parent=11 // pred_fallthru
          _
      $region12: #{tpu_custom_call.1} parent=5 // pred_fallthru
        _
      %p404 = scmp.lt.s32.totalorder %s23, 2
      // Predicated region
      $region61: #{tpu_custom_call.1} parent=5 // pred_check
        %p405 = pneg %p404
      $region62: #{tpu_custom_call.1} parent=5 // pred_check_branch
        %407 = sbr.rel (%p405) target = $region64
      $region63: #{tpu_custom_call.1} parent=5 // pred_region
        // Predicated region
        $region65: #{tpu_custom_call.1} parent=63 // pred_check
          %p408 = pneg %p43
        $region66: #{tpu_custom_call.1} parent=63 // pred_check_branch
          %410 = sbr.rel (%p408) target = $region68
        $region67: #{tpu_custom_call.1} parent=63 // pred_region
          %s411 = smul.u32 2, %s23
          %p412 = scmp.lt.s32.totalorder %s411, 3
          %s413 = scalar_select %p412, %s411, 3
          %s414 = smul.addr %s413, 4
          %s415 = scalar_lea.vmem %s0, %s414
          %s416 = smul.u32 2, %s23
        $region68: #{tpu_custom_call.1} parent=63 // pred_fallthru
          _
        // Predicated region
        $region69: #{tpu_custom_call.1} parent=63 // pred_check
          %p417 = pneg %p69
        $region70: #{tpu_custom_call.1} parent=63 // pred_check_branch
          %419 = sbr.rel (%p417) target = $region72
        $region71: #{tpu_custom_call.1} parent=63 // pred_region
          %s420 = smul.u32 2, %s23
          %p421 = scmp.lt.s32.totalorder %s420, 3
          %s422 = scalar_select %p421, %s420, 3
          %s423 = smul.addr %s422, 96
          %s424 = smul.addr %s423, 4
          %s425 = scalar_lea.vmem %s1, %s424
          %s426 = smul.u32 2, %s23
        $region72: #{tpu_custom_call.1} parent=63 // pred_fallthru
          _
      $region64: #{tpu_custom_call.1} parent=5 // pred_fallthru
        _
      %p427 = scmp.le.s32.totalorder 1, %s23
      %p428 = scmp.lt.s32.totalorder %s23, 3
      %p429 = pnand %p427, %p428
      %p430 = pneg %p429
      // Predicated region
      $region73: #{tpu_custom_call.1} parent=5 // pred_check
        _
      $region74: #{tpu_custom_call.1} parent=5 // pred_check_branch
        %432 = sbr.rel (%p429) target = $region76
      $region75: #{tpu_custom_call.1} parent=5 // pred_region
        %s433 = ssub.s32 %s23, 1
        %s434 = smul.u32 2, %s28
        %p435 = scmp.lt.s32.totalorder %s434, 3
        %s436 = scalar_select %p435, %s434, 3
        %s437 = smul.addr %s436, 4
        %s438 = scalar_lea.vmem %s0, %s437
        %p439 = pneg %p49
        %p440 = pneg %p46
        %s441 = smul.u32 2, %s28
        %p442 = scmp.lt.s32.totalorder %s441, 3
        %s443 = scalar_select %p442, %s441, 3
        %s444 = smul.addr %s443, 96
        %s445 = smul.addr %s444, 4
        %s446 = scalar_lea.vmem %s1, %s445
        %p447 = pneg %p75
        %p448 = pneg %p72
        %p449 = pneg %p96
        %p450 = pneg %p93
        %p451 = pneg %p117
        %p452 = pneg %p114
        %p453 = pneg %p138
        %p454 = pneg %p135
        %p455 = pneg %p159
        %p456 = pneg %p156
        %p457 = pneg %p180
        %p458 = pneg %p177
        %p459 = pneg %p201
        %p460 = pneg %p198
        %p461 = pneg %p222
        %p462 = pneg %p219
        %p463 = pneg %p243
        %p464 = pneg %p240
        %p465 = pneg %p264
        %p466 = pneg %p261
        %p467 = pneg %p285
        %p468 = pneg %p282
        %p469 = pneg %p306
        %p470 = pneg %p303
        %p471 = pneg %p327
        %p472 = pneg %p324
        %p473 = pneg %p353
        %p474 = pneg %p350
        %s475 = sand.u32 %s340, 1
        %s476 = scalar_lea.sflag [#allocation3], %s475
        %s477 = sand.u32 %s340, 1
        %s478 = smul.addr %s477, 16
        %s479 = scalar_lea.vmem [#allocation2], %s478
        %s480 = smul.u32 2, %s28
        %p481 = scmp.lt.s32.totalorder %s480, 3
        %s482 = scalar_select %p481, %s480, 3
        %s483 = smul.addr %s482, 4
        %s484 = scalar_lea.vmem %s0, %s483
        %s485 = smul.u32 2, %s28
        %s486 = smul.u32 2, %s28
        %p487 = scmp.lt.s32.totalorder %s486, 3
        %s488 = scalar_select %p487, %s486, 3
        %s489 = smul.addr %s488, 96
        %s490 = smul.addr %s489, 4
        %s491 = scalar_lea.vmem %s1, %s490
        %s492 = smul.u32 2, %s28
        %s493 = smul.u32 2, %s28
        %v495 = vld [vmem:[%s2] sm:$0xff]
        %v496 = vld [vmem:[%s2 + $0x8] sm:$0xff]
        %v497 = vld [vmem:[%s2 + $0x10] sm:$0xff]
        %v498 = vld [vmem:[%s2 + $0x18] sm:$0xff]
        %v499 = vld [vmem:[%s2 + $0x20] sm:$0xff]
        %v500 = vld [vmem:[%s2 + $0x28] sm:$0xff]
        %v501 = vld [vmem:[%s2 + $0x30] sm:$0xff]
        %v502 = vld [vmem:[%s2 + $0x38] sm:$0xff]
        %v503 = vld [vmem:[%s2 + $0x40] sm:$0xff]
        %v504 = vld [vmem:[%s2 + $0x48] sm:$0xff]
        %v505 = vld [vmem:[%s2 + $0x50] sm:$0xff]
        %v506 = vld [vmem:[%s2 + $0x58] sm:$0xff]
        %v507 = vld [vmem:[%s3] sm:$0xff]
        %v508 = vld [vmem:[%s3 + $0x8] sm:$0xff]
        %v509 = vld [vmem:[%s3 + $0x10] sm:$0xff]
        %v510 = vld [vmem:[%s3 + $0x18] sm:$0xff]
        %v511 = vld [vmem:[%s4] sm:$0xf]
        %v512 = vld [vmem:[%s4 + $0x4] sm:$0xf]
        %v513 = vld [vmem:[%s4 + $0x8] sm:$0xf]
        %v514 = vld [vmem:[%s4 + $0xc] sm:$0xf]
        %v515 = vld [vmem:[%s5] sm:$0x1]
        %v516 = vld [vmem:[%s8] sm:$0xff]
        %v517 = vld [vmem:[%s8 + $0x8] sm:$0xff]
        %v518 = vld [vmem:[%s8 + $0x10] sm:$0xff]
        %v519 = vld [vmem:[%s8 + $0x18] sm:$0xff]
        %v520 = vld [vmem:[%s9] sm:$0x1]
        %v521 = vld [vmem:[%s10] sm:$0xff]
        %v522 = vld [vmem:[%s10 + $0x8] sm:$0xff]
        %v523 = vld [vmem:[%s10 + $0x10] sm:$0xff]
        %v524 = vld [vmem:[%s10 + $0x18] sm:$0xff]
        %v525 = vld [vmem:[%s11] sm:$0x1]
        %v526 = vld [vmem:[%s6] sm:$0x1]
        %v527 = vld [vmem:[%s7] sm:$0x1]
        %v528 = vld [vmem:[%s12] sm:$0x1]
        %v529 = vld [vmem:[%s13] sm:$0x1]
        %v530 = vld [vmem:[%s491] sm:$0xf]
        %v531 = vld [vmem:[%s491 + $0x4] sm:$0xf]
        %v532 = vld [vmem:[%s491 + $0x8] sm:$0xf]
        %v533 = vld [vmem:[%s491 + $0xc] sm:$0xf]
        %v534 = vld [vmem:[%s491 + $0x10] sm:$0xf]
        %v535 = vld [vmem:[%s491 + $0x14] sm:$0xf]
        %v536 = vld [vmem:[%s491 + $0x18] sm:$0xf]
        %v537 = vld [vmem:[%s491 + $0x1c] sm:$0xf]
        %v538 = vld [vmem:[%s491 + $0x20] sm:$0xf]
        %v539 = vld [vmem:[%s491 + $0x24] sm:$0xf]
        %v540 = vld [vmem:[%s491 + $0x28] sm:$0xf]
        %v541 = vld [vmem:[%s491 + $0x2c] sm:$0xf]
        %v542 = vld [vmem:[%s491 + $0x30] sm:$0xf]
        %v543 = vld [vmem:[%s491 + $0x34] sm:$0xf]
        %v544 = vld [vmem:[%s491 + $0x38] sm:$0xf]
        %v545 = vld [vmem:[%s491 + $0x3c] sm:$0xf]
        %v546 = vld [vmem:[%s491 + $0x40] sm:$0xf]
        %v547 = vld [vmem:[%s491 + $0x44] sm:$0xf]
        %v548 = vld [vmem:[%s491 + $0x48] sm:$0xf]
        %v549 = vld [vmem:[%s491 + $0x4c] sm:$0xf]
        %v550 = vld [vmem:[%s491 + $0x50] sm:$0xf]
        %v551 = vld [vmem:[%s491 + $0x54] sm:$0xf]
        %v552 = vld [vmem:[%s491 + $0x58] sm:$0xf]
        %v553 = vld [vmem:[%s491 + $0x5c] sm:$0xf]
        %v554 = vld [vmem:[%s491 + $0x60] sm:$0xf]
        %v555 = vld [vmem:[%s491 + $0x64] sm:$0xf]
        %v556 = vld [vmem:[%s491 + $0x68] sm:$0xf]
        %v557 = vld [vmem:[%s491 + $0x6c] sm:$0xf]
        %v558 = vld [vmem:[%s491 + $0x70] sm:$0xf]
        %v559 = vld [vmem:[%s491 + $0x74] sm:$0xf]
        %v560 = vld [vmem:[%s491 + $0x78] sm:$0xf]
        %v561 = vld [vmem:[%s491 + $0x7c] sm:$0xf]
        %v562 = vld [vmem:[%s491 + $0x80] sm:$0xf]
        %v563 = vld [vmem:[%s491 + $0x84] sm:$0xf]
        %v564 = vld [vmem:[%s491 + $0x88] sm:$0xf]
        %v565 = vld [vmem:[%s491 + $0x8c] sm:$0xf]
        %v566 = vld [vmem:[%s491 + $0x90] sm:$0xf]
        %v567 = vld [vmem:[%s491 + $0x94] sm:$0xf]
        %v568 = vld [vmem:[%s491 + $0x98] sm:$0xf]
        %v569 = vld [vmem:[%s491 + $0x9c] sm:$0xf]
        %v570 = vld [vmem:[%s491 + $0xa0] sm:$0xf]
        %v571 = vld [vmem:[%s491 + $0xa4] sm:$0xf]
        %v572 = vld [vmem:[%s491 + $0xa8] sm:$0xf]
        %v573 = vld [vmem:[%s491 + $0xac] sm:$0xf]
        %v574 = vld [vmem:[%s491 + $0xb0] sm:$0xf]
        %v575 = vld [vmem:[%s491 + $0xb4] sm:$0xf]
        %v576 = vld [vmem:[%s491 + $0xb8] sm:$0xf]
        %v577 = vld [vmem:[%s491 + $0xbc] sm:$0xf]
        %v578 = vld [vmem:[%s491 + $0xc0] sm:$0xf]
        %v579 = vld [vmem:[%s491 + $0xc4] sm:$0xf]
        %v580 = vld [vmem:[%s491 + $0xc8] sm:$0xf]
        %v581 = vld [vmem:[%s491 + $0xcc] sm:$0xf]
        %v582 = vld [vmem:[%s491 + $0xd0] sm:$0xf]
        %v583 = vld [vmem:[%s491 + $0xd4] sm:$0xf]
        %v584 = vld [vmem:[%s491 + $0xd8] sm:$0xf]
        %v585 = vld [vmem:[%s491 + $0xdc] sm:$0xf]
        %v586 = vld [vmem:[%s491 + $0xe0] sm:$0xf]
        %v587 = vld [vmem:[%s491 + $0xe4] sm:$0xf]
        %v588 = vld [vmem:[%s491 + $0xe8] sm:$0xf]
        %v589 = vld [vmem:[%s491 + $0xec] sm:$0xf]
        %v590 = vld [vmem:[%s491 + $0xf0] sm:$0xf]
        %v591 = vld [vmem:[%s491 + $0xf4] sm:$0xf]
        %v592 = vld [vmem:[%s491 + $0xf8] sm:$0xf]
        %v593 = vld [vmem:[%s491 + $0xfc] sm:$0xf]
        %v594 = vld [vmem:[%s491 + $0x100] sm:$0xf]
        %v595 = vld [vmem:[%s491 + $0x104] sm:$0xf]
        %v596 = vld [vmem:[%s491 + $0x108] sm:$0xf]
        %v597 = vld [vmem:[%s491 + $0x10c] sm:$0xf]
        %v598 = vld [vmem:[%s491 + $0x110] sm:$0xf]
        %v599 = vld [vmem:[%s491 + $0x114] sm:$0xf]
        %v600 = vld [vmem:[%s491 + $0x118] sm:$0xf]
        %v601 = vld [vmem:[%s491 + $0x11c] sm:$0xf]
        %v602 = vld [vmem:[%s491 + $0x120] sm:$0xf]
        %v603 = vld [vmem:[%s491 + $0x124] sm:$0xf]
        %v604 = vld [vmem:[%s491 + $0x128] sm:$0xf]
        %v605 = vld [vmem:[%s491 + $0x12c] sm:$0xf]
        %v606 = vld [vmem:[%s491 + $0x130] sm:$0xf]
        %v607 = vld [vmem:[%s491 + $0x134] sm:$0xf]
        %v608 = vld [vmem:[%s491 + $0x138] sm:$0xf]
        %v609 = vld [vmem:[%s491 + $0x13c] sm:$0xf]
        %v610 = vld [vmem:[%s491 + $0x140] sm:$0xf]
        %v611 = vld [vmem:[%s491 + $0x144] sm:$0xf]
        %v612 = vld [vmem:[%s491 + $0x148] sm:$0xf]
        %v613 = vld [vmem:[%s491 + $0x14c] sm:$0xf]
        %v614 = vld [vmem:[%s491 + $0x150] sm:$0xf]
        %v615 = vld [vmem:[%s491 + $0x154] sm:$0xf]
        %v616 = vld [vmem:[%s491 + $0x158] sm:$0xf]
        %v617 = vld [vmem:[%s491 + $0x15c] sm:$0xf]
        %v618 = vld [vmem:[%s491 + $0x160] sm:$0xf]
        %v619 = vld [vmem:[%s491 + $0x164] sm:$0xf]
        %v620 = vld [vmem:[%s491 + $0x168] sm:$0xf]
        %v621 = vld [vmem:[%s491 + $0x16c] sm:$0xf]
        %v622 = vld [vmem:[%s491 + $0x170] sm:$0xf]
        %v623 = vld [vmem:[%s491 + $0x174] sm:$0xf]
        %v624 = vld [vmem:[%s491 + $0x178] sm:$0xf]
        %v625 = vld [vmem:[%s491 + $0x17c] sm:$0xf]
        %v626 = vld [vmem:[%s484] sm:$0xf]
        %628 = vset.pattern.permute.xlu0 0
        %629 = vperm.xlu0 %628, %v507
        %v630 = vpop.permute.xlu0 %629
        %633 = vset.pattern.permute.xlu0 0
        %634 = vperm.xlu0 %633, %v508
        %v635 = vpop.permute.xlu0 %634
        %638 = vset.pattern.permute.xlu0 0
        %639 = vperm.xlu0 %638, %v509
        %v640 = vpop.permute.xlu0 %639
        %643 = vset.pattern.permute.xlu0 0
        %644 = vperm.xlu0 %643, %v510
        %v645 = vpop.permute.xlu0 %644
        %v659 = vunpack.c.l.b16 %v495
        %v660 = vunpack.c.h.b16 %v495
        %v661 = vunpack.c.l.b16 %v496
        %v662 = vunpack.c.h.b16 %v496
        %v663 = vunpack.c.l.b16 %v497
        %v664 = vunpack.c.h.b16 %v497
        %v665 = vunpack.c.l.b16 %v498
        %v666 = vunpack.c.h.b16 %v498
        %v667 = vunpack.c.l.b16 %v499
        %v668 = vunpack.c.h.b16 %v499
        %v669 = vunpack.c.l.b16 %v500
        %v670 = vunpack.c.h.b16 %v500
        %v671 = vunpack.c.l.b16 %v501
        %v672 = vunpack.c.h.b16 %v501
        %v673 = vunpack.c.l.b16 %v502
        %v674 = vunpack.c.h.b16 %v502
        %v675 = vunpack.c.l.b16 %v503
        %v676 = vunpack.c.h.b16 %v503
        %v677 = vunpack.c.l.b16 %v504
        %v678 = vunpack.c.h.b16 %v504
        %v679 = vunpack.c.l.b16 %v505
        %v680 = vunpack.c.h.b16 %v505
        %v681 = vunpack.c.l.b16 %v506
        %v682 = vunpack.c.h.b16 %v506
        %v683 = vpack.c.b16 %v665, %v659
        %v684 = vpack.c.b16 %v666, %v660
        %v685 = vpack.c.b16 %v667, %v661
        %v686 = vpack.c.b16 %v668, %v662
        %v687 = vpack.c.b16 %v669, %v663
        %v688 = vpack.c.b16 %v670, %v664
        %v689 = vpack.c.b16 %v677, %v671
        %v690 = vpack.c.b16 %v678, %v672
        %v691 = vpack.c.b16 %v679, %v673
        %v692 = vpack.c.b16 %v680, %v674
        %v693 = vpack.c.b16 %v681, %v675
        %v694 = vpack.c.b16 %v682, %v676
        %v803 = vunpack.c.l.b16 %v530
        %v804 = vunpack.c.l.b16 %v531
        %v805 = vunpack.c.l.b16 %v532
        %v806 = vunpack.c.l.b16 %v533
        %v807 = vunpack.c.l.b16 %v534
        %v808 = vunpack.c.l.b16 %v535
        %v809 = vunpack.c.l.b16 %v536
        %v810 = vunpack.c.l.b16 %v537
        %v811 = vunpack.c.l.b16 %v538
        %v812 = vunpack.c.l.b16 %v539
        %v813 = vunpack.c.l.b16 %v540
        %v814 = vunpack.c.l.b16 %v541
        %v815 = vunpack.c.l.b16 %v542
        %v816 = vunpack.c.l.b16 %v543
        %v817 = vunpack.c.l.b16 %v544
        %v818 = vunpack.c.l.b16 %v545
        %v819 = vunpack.c.l.b16 %v546
        %v820 = vunpack.c.l.b16 %v547
        %v821 = vunpack.c.l.b16 %v548
        %v822 = vunpack.c.l.b16 %v549
        %v823 = vunpack.c.l.b16 %v550
        %v824 = vunpack.c.l.b16 %v551
        %v825 = vunpack.c.l.b16 %v552
        %v826 = vunpack.c.l.b16 %v553
        %v827 = vunpack.c.l.b16 %v554
        %v828 = vunpack.c.l.b16 %v555
        %v829 = vunpack.c.l.b16 %v556
        %v830 = vunpack.c.l.b16 %v557
        %v831 = vunpack.c.l.b16 %v558
        %v832 = vunpack.c.l.b16 %v559
        %v833 = vunpack.c.l.b16 %v560
        %v834 = vunpack.c.l.b16 %v561
        %v835 = vunpack.c.l.b16 %v562
        %v836 = vunpack.c.l.b16 %v563
        %v837 = vunpack.c.l.b16 %v564
        %v838 = vunpack.c.l.b16 %v565
        %v839 = vunpack.c.l.b16 %v566
        %v840 = vunpack.c.l.b16 %v567
        %v841 = vunpack.c.l.b16 %v568
        %v842 = vunpack.c.l.b16 %v569
        %v843 = vunpack.c.l.b16 %v570
        %v844 = vunpack.c.l.b16 %v571
        %v845 = vunpack.c.l.b16 %v572
        %v846 = vunpack.c.l.b16 %v573
        %v847 = vunpack.c.l.b16 %v574
        %v848 = vunpack.c.l.b16 %v575
        %v849 = vunpack.c.l.b16 %v576
        %v850 = vunpack.c.l.b16 %v577
        %v851 = vunpack.c.l.b16 %v578
        %v852 = vunpack.c.l.b16 %v579
        %v853 = vunpack.c.l.b16 %v580
        %v854 = vunpack.c.l.b16 %v581
        %v855 = vunpack.c.l.b16 %v582
        %v856 = vunpack.c.l.b16 %v583
        %v857 = vunpack.c.l.b16 %v584
        %v858 = vunpack.c.l.b16 %v585
        %v859 = vunpack.c.l.b16 %v586
        %v860 = vunpack.c.l.b16 %v587
        %v861 = vunpack.c.l.b16 %v588
        %v862 = vunpack.c.l.b16 %v589
        %v863 = vunpack.c.l.b16 %v590
        %v864 = vunpack.c.l.b16 %v591
        %v865 = vunpack.c.l.b16 %v592
        %v866 = vunpack.c.l.b16 %v593
        %v867 = vunpack.c.l.b16 %v594
        %v868 = vunpack.c.l.b16 %v595
        %v869 = vunpack.c.l.b16 %v596
        %v870 = vunpack.c.l.b16 %v597
        %v871 = vunpack.c.l.b16 %v598
        %v872 = vunpack.c.l.b16 %v599
        %v873 = vunpack.c.l.b16 %v600
        %v874 = vunpack.c.l.b16 %v601
        %v875 = vunpack.c.l.b16 %v602
        %v876 = vunpack.c.l.b16 %v603
        %v877 = vunpack.c.l.b16 %v604
        %v878 = vunpack.c.l.b16 %v605
        %v879 = vunpack.c.l.b16 %v606
        %v880 = vunpack.c.l.b16 %v607
        %v881 = vunpack.c.l.b16 %v608
        %v882 = vunpack.c.l.b16 %v609
        %v883 = vunpack.c.l.b16 %v610
        %v884 = vunpack.c.l.b16 %v611
        %v885 = vunpack.c.l.b16 %v612
        %v886 = vunpack.c.l.b16 %v613
        %v887 = vunpack.c.l.b16 %v614
        %v888 = vunpack.c.l.b16 %v615
        %v889 = vunpack.c.l.b16 %v616
        %v890 = vunpack.c.l.b16 %v617
        %v891 = vunpack.c.l.b16 %v618
        %v892 = vunpack.c.l.b16 %v619
        %v893 = vunpack.c.l.b16 %v620
        %v894 = vunpack.c.l.b16 %v621
        %v895 = vunpack.c.l.b16 %v622
        %v896 = vunpack.c.l.b16 %v623
        %v897 = vunpack.c.l.b16 %v624
        %v898 = vunpack.c.l.b16 %v625
        %v899 = vpack.c.b16 %v804, %v803
        %v900 = vpack.c.b16 %v806, %v805
        %v901 = vpack.c.b16 %v808, %v807
        %v902 = vpack.c.b16 %v810, %v809
        %v903 = vpack.c.b16 %v812, %v811
        %v904 = vpack.c.b16 %v814, %v813
        %v905 = vpack.c.b16 %v816, %v815
        %v906 = vpack.c.b16 %v818, %v817
        %v907 = vpack.c.b16 %v820, %v819
        %v908 = vpack.c.b16 %v822, %v821
        %v909 = vpack.c.b16 %v824, %v823
        %v910 = vpack.c.b16 %v826, %v825
        %v911 = vpack.c.b16 %v828, %v827
        %v912 = vpack.c.b16 %v830, %v829
        %v913 = vpack.c.b16 %v832, %v831
        %v914 = vpack.c.b16 %v834, %v833
        %v915 = vpack.c.b16 %v836, %v835
        %v916 = vpack.c.b16 %v838, %v837
        %v917 = vpack.c.b16 %v840, %v839
        %v918 = vpack.c.b16 %v842, %v841
        %v919 = vpack.c.b16 %v844, %v843
        %v920 = vpack.c.b16 %v846, %v845
        %v921 = vpack.c.b16 %v848, %v847
        %v922 = vpack.c.b16 %v850, %v849
        %v923 = vpack.c.b16 %v852, %v851
        %v924 = vpack.c.b16 %v854, %v853
        %v925 = vpack.c.b16 %v856, %v855
        %v926 = vpack.c.b16 %v858, %v857
        %v927 = vpack.c.b16 %v860, %v859
        %v928 = vpack.c.b16 %v862, %v861
        %v929 = vpack.c.b16 %v864, %v863
        %v930 = vpack.c.b16 %v866, %v865
        %v931 = vpack.c.b16 %v868, %v867
        %v932 = vpack.c.b16 %v870, %v869
        %v933 = vpack.c.b16 %v872, %v871
        %v934 = vpack.c.b16 %v874, %v873
        %v935 = vpack.c.b16 %v876, %v875
        %v936 = vpack.c.b16 %v878, %v877
        %v937 = vpack.c.b16 %v880, %v879
        %v938 = vpack.c.b16 %v882, %v881
        %v939 = vpack.c.b16 %v884, %v883
        %v940 = vpack.c.b16 %v886, %v885
        %v941 = vpack.c.b16 %v888, %v887
        %v942 = vpack.c.b16 %v890, %v889
        %v943 = vpack.c.b16 %v892, %v891
        %v944 = vpack.c.b16 %v894, %v893
        %v945 = vpack.c.b16 %v896, %v895
        %v946 = vpack.c.b16 %v898, %v897
        %995 = vmatprep.subr.bf16.mxu0 0
        %996 = vmatpush1.bf16.msra.mxu0 %v899
        %997 = vmatprep.subr.bf16.mxu0 0
        %998 = vmatpush1.bf16.msra.mxu0 %v900
        %999 = vmatprep.subr.bf16.mxu0 0
        %1000 = vmatpush1.bf16.msra.mxu0 %v901
        %1001 = vmatprep.subr.bf16.mxu0 0
        %1002 = vmatpush1.bf16.msra.mxu0 %v902
        %1003 = vmatprep.subr.bf16.mxu0 0
        %1004 = vmatpush1.bf16.msra.mxu0 %v903
        %1005 = vmatprep.subr.bf16.mxu0 0
        %1006 = vmatpush1.bf16.msra.mxu0 %v904
        %1007 = vmatprep.subr.bf16.mxu0 0
        %1008 = vmatpush1.bf16.msra.mxu0 %v905
        %1009 = vmatprep.subr.bf16.mxu0 0
        %1010 = vmatpush1.bf16.msra.mxu0 %v906
        %1011 = vmatprep.subr.bf16.mxu0 0
        %1012 = vmatpush1.bf16.msra.mxu0 %v907
        %1013 = vmatprep.subr.bf16.mxu0 0
        %1014 = vmatpush1.bf16.msra.mxu0 %v908
        %1015 = vmatprep.subr.bf16.mxu0 0
        %1016 = vmatpush1.bf16.msra.mxu0 %v909
        %1017 = vmatprep.subr.bf16.mxu0 0
        %1018 = vmatpush1.bf16.msra.mxu0 %v910
        %1019 = vmatprep.subr.bf16.mxu0 0
        %1020 = vmatpush1.bf16.msra.mxu0 %v911
        %1021 = vmatprep.subr.bf16.mxu0 0
        %1022 = vmatpush1.bf16.msra.mxu0 %v912
        %1023 = vmatprep.subr.bf16.mxu0 0
        %1024 = vmatpush1.bf16.msra.mxu0 %v913
        %1025 = vmatprep.subr.bf16.mxu0 0
        %1026 = vmatpush1.bf16.msra.mxu0 %v914
        %1027 = vmatprep.mubr.bf16.mxu0 %v684
        %1028 = vmatmul.mubr.bf16.gmra.mrb[0].mxu0 %v683
        %v1029 = vpop.f32.mrb[0].mxu0
        %v1030 = vadd.f32 %v630, %v1029
        %v1031 = vpop.f32.mrb[0].mxu0
        %v1032 = vpop.f32.mrb[0].mxu0
        %v1033 = vadd.f32 %v635, %v1032
        %v1034 = vpop.f32.mrb[0].mxu0
        %1035 = vmatprep.mubr.bf16.mxu0 %v690
        %1036 = vmatmul.mubr.bf16.gmra.mrb[0].mxu0 %v689
        %v1037 = vpop.f32.mrb[0].mxu0
        %v1038 = vadd.f32 %v640, %v1037
        %v1039 = vpop.f32.mrb[0].mxu0
        %v1040 = vpop.f32.mrb[0].mxu0
        %v1041 = vadd.f32 %v645, %v1040
        %v1042 = vpop.f32.mrb[0].mxu0
        %1043 = vdwg.mxu0
        %1044 = vmatprep.subr.bf16.mxu0 0
        %1045 = vmatpush1.bf16.msra.mxu0 %v915
        %1046 = vmatprep.subr.bf16.mxu0 0
        %1047 = vmatpush1.bf16.msra.mxu0 %v916
        %1048 = vmatprep.subr.bf16.mxu0 0
        %1049 = vmatpush1.bf16.msra.mxu0 %v917
        %1050 = vmatprep.subr.bf16.mxu0 0
        %1051 = vmatpush1.bf16.msra.mxu0 %v918
        %1052 = vmatprep.subr.bf16.mxu0 0
        %1053 = vmatpush1.bf16.msra.mxu0 %v919
        %1054 = vmatprep.subr.bf16.mxu0 0
        %1055 = vmatpush1.bf16.msra.mxu0 %v920
        %1056 = vmatprep.subr.bf16.mxu0 0
        %1057 = vmatpush1.bf16.msra.mxu0 %v921
        %1058 = vmatprep.subr.bf16.mxu0 0
        %1059 = vmatpush1.bf16.msra.mxu0 %v922
        %1060 = vmatprep.subr.bf16.mxu0 0
        %1061 = vmatpush1.bf16.msra.mxu0 %v923
        %1062 = vmatprep.subr.bf16.mxu0 0
        %1063 = vmatpush1.bf16.msra.mxu0 %v924
        %1064 = vmatprep.subr.bf16.mxu0 0
        %1065 = vmatpush1.bf16.msra.mxu0 %v925
        %1066 = vmatprep.subr.bf16.mxu0 0
        %1067 = vmatpush1.bf16.msra.mxu0 %v926
        %1068 = vmatprep.subr.bf16.mxu0 0
        %1069 = vmatpush1.bf16.msra.mxu0 %v927
        %1070 = vmatprep.subr.bf16.mxu0 0
        %1071 = vmatpush1.bf16.msra.mxu0 %v928
        %1072 = vmatprep.subr.bf16.mxu0 0
        %1073 = vmatpush1.bf16.msra.mxu0 %v929
        %1074 = vmatprep.subr.bf16.mxu0 0
        %1075 = vmatpush1.bf16.msra.mxu0 %v930
        %1076 = vmatprep.mubr.bf16.mxu0 %v686
        %1077 = vmatmul.mubr.bf16.gmra.mrb[0].mxu0 %v685
        %v1078 = vpop.f32.mrb[0].mxu0
        %v1079 = vadd.f32 %v1030, %v1078
        %v1080 = vpop.f32.mrb[0].mxu0
        %v1081 = vpop.f32.mrb[0].mxu0
        %v1082 = vadd.f32 %v1033, %v1081
        %v1083 = vpop.f32.mrb[0].mxu0
        %1084 = vmatprep.mubr.bf16.mxu0 %v692
        %1085 = vmatmul.mubr.bf16.gmra.mrb[0].mxu0 %v691
        %v1086 = vpop.f32.mrb[0].mxu0
        %v1087 = vadd.f32 %v1038, %v1086
        %v1088 = vpop.f32.mrb[0].mxu0
        %v1089 = vpop.f32.mrb[0].mxu0
        %v1090 = vadd.f32 %v1041, %v1089
        %v1091 = vpop.f32.mrb[0].mxu0
        %1092 = vdwg.mxu0
        %1093 = vmatprep.subr.bf16.mxu0 0
        %1094 = vmatpush1.bf16.msra.mxu0 %v931
        %1095 = vmatprep.subr.bf16.mxu0 0
        %1096 = vmatpush1.bf16.msra.mxu0 %v932
        %1097 = vmatprep.subr.bf16.mxu0 0
        %1098 = vmatpush1.bf16.msra.mxu0 %v933
        %1099 = vmatprep.subr.bf16.mxu0 0
        %1100 = vmatpush1.bf16.msra.mxu0 %v934
        %1101 = vmatprep.subr.bf16.mxu0 0
        %1102 = vmatpush1.bf16.msra.mxu0 %v935
        %1103 = vmatprep.subr.bf16.mxu0 0
        %1104 = vmatpush1.bf16.msra.mxu0 %v936
        %1105 = vmatprep.subr.bf16.mxu0 0
        %1106 = vmatpush1.bf16.msra.mxu0 %v937
        %1107 = vmatprep.subr.bf16.mxu0 0
        %1108 = vmatpush1.bf16.msra.mxu0 %v938
        %1109 = vmatprep.subr.bf16.mxu0 0
        %1110 = vmatpush1.bf16.msra.mxu0 %v939
        %1111 = vmatprep.subr.bf16.mxu0 0
        %1112 = vmatpush1.bf16.msra.mxu0 %v940
        %1113 = vmatprep.subr.bf16.mxu0 0
        %1114 = vmatpush1.bf16.msra.mxu0 %v941
        %1115 = vmatprep.subr.bf16.mxu0 0
        %1116 = vmatpush1.bf16.msra.mxu0 %v942
        %1117 = vmatprep.subr.bf16.mxu0 0
        %1118 = vmatpush1.bf16.msra.mxu0 %v943
        %1119 = vmatprep.subr.bf16.mxu0 0
        %1120 = vmatpush1.bf16.msra.mxu0 %v944
        %1121 = vmatprep.subr.bf16.mxu0 0
        %1122 = vmatpush1.bf16.msra.mxu0 %v945
        %1123 = vmatprep.subr.bf16.mxu0 0
        %1124 = vmatpush1.bf16.msra.mxu0 %v946
        %1125 = vmatprep.mubr.bf16.mxu0 %v688
        %1126 = vmatmul.mubr.bf16.gmra.mrb[0].mxu0 %v687
        %v1127 = vpop.f32.mrb[0].mxu0
        %v1128 = vadd.f32 %v1079, %v1127
        %v1129 = vpop.f32.mrb[0].mxu0
        %v1130 = vpop.f32.mrb[0].mxu0
        %v1131 = vadd.f32 %v1082, %v1130
        %v1132 = vpop.f32.mrb[0].mxu0
        %1133 = vmatprep.mubr.bf16.mxu0 %v694
        %1134 = vmatmul.mubr.bf16.gmra.mrb[0].mxu0 %v693
        %v1135 = vpop.f32.mrb[0].mxu0
        %v1136 = vadd.f32 %v1087, %v1135
        %v1137 = vpop.f32.mrb[0].mxu0
        %v1138 = vpop.f32.mrb[0].mxu0
        %v1139 = vadd.f32 %v1090, %v1138
        %v1140 = vpop.f32.mrb[0].mxu0
        %1141 = vdwg.mxu0
        %v1143 = vlaneseq
        %v1144 = vshrl.u32 %v1143, 7
        %v1145 = vsub.s32 0, %v1144
        %v1146 = vrot.slane %v515, %v1145
        %v1152 = vunpack.c.l.b16 %v511
        %v1153 = vunpack.c.l.b16 %v512
        %v1154 = vunpack.c.l.b16 %v513
        %v1155 = vunpack.c.l.b16 %v514
        %v1156 = vpack.c.b16 %v1153, %v1152
        %v1157 = vpack.c.b16 %v1155, %v1154
        %vm1160 = vcmask 261120
        %v1162 = vsel %vm1160, %v626, 0
        %1164 = vmatprep.subr.bf16.mxu0 0
        %1165 = vmatpush1.bf16.msra.mxu0 %v1156
        %1166 = vmatprep.subr.bf16.mxu0 0
        %1167 = vmatpush1.bf16.msra.mxu0 %v1157
        %1168 = vmatprep.subr.bf16.mxu0 0
        %1169 = vmatpush1.bf16.msra.mxu0 0
        %1170 = vmatprep.subr.bf16.mxu0 0
        %1171 = vmatpush1.bf16.msra.mxu0 0
        %1172 = vmatprep.subr.bf16.mxu0 0
        %1173 = vmatpush1.bf16.msra.mxu0 0
        %1174 = vmatprep.subr.bf16.mxu0 0
        %1175 = vmatpush1.bf16.msra.mxu0 0
        %1176 = vmatprep.subr.bf16.mxu0 0
        %1177 = vmatpush1.bf16.msra.mxu0 0
        %1178 = vmatprep.subr.bf16.mxu0 0
        %1179 = vmatpush1.bf16.msra.mxu0 0
        %1180 = vmatprep.subr.bf16.mxu0 0
        %1181 = vmatpush1.bf16.msra.mxu0 0
        %1182 = vmatprep.subr.bf16.mxu0 0
        %1183 = vmatpush1.bf16.msra.mxu0 0
        %1184 = vmatprep.subr.bf16.mxu0 0
        %1185 = vmatpush1.bf16.msra.mxu0 0
        %1186 = vmatprep.subr.bf16.mxu0 0
        %1187 = vmatpush1.bf16.msra.mxu0 0
        %1188 = vmatprep.subr.bf16.mxu0 0
        %1189 = vmatpush1.bf16.msra.mxu0 0
        %1190 = vmatprep.subr.bf16.mxu0 0
        %1191 = vmatpush1.bf16.msra.mxu0 0
        %1192 = vmatprep.subr.bf16.mxu0 0
        %1193 = vmatpush1.bf16.msra.mxu0 0
        %1194 = vmatprep.subr.bf16.mxu0 0
        %1195 = vmatpush1.bf16.msra.mxu0 0
        %1196 = vmatprep.mubr.bf16.mxu0 0
        %1197 = vmatmul.mubr.bf16.gmra.mrb[0].mxu0 %v1162
        %v1198 = vpop.f32.mrb[0].mxu0
        %v1199 = vadd.f32 %v1146, %v1198
        %v1200 = vpop.f32.mrb[0].mxu0
        %v1201 = vpop.f32.mrb[0].mxu0
        %v1202 = vpop.f32.mrb[0].mxu0
        %1203 = vdwg.mxu0
        %v1205 = vsel %vm1160, %v1199, 0
        %1207 = vmatprep.subr.mxu0 0.0
        %1208 = vmatpush1.msra.mxu0 %v1128
        %1209 = vmatprep.subr.mxu0 0.0
        %1210 = vmatpush1.msra.mxu0 %v1131
        %1211 = vmatprep.subr.mxu0 0.0
        %1212 = vmatpush1.msra.mxu0 %v1136
        %1213 = vmatprep.subr.mxu0 0.0
        %1214 = vmatpush1.msra.mxu0 %v1139
        %1215 = vmatprep.subr.mxu0 0.0
        %1216 = vmatpush1.msra.mxu0 0.0
        %1217 = vmatprep.subr.mxu0 0.0
        %1218 = vmatpush1.msra.mxu0 0.0
        %1219 = vmatprep.subr.mxu0 0.0
        %1220 = vmatpush1.msra.mxu0 0.0
        %1221 = vmatprep.subr.mxu0 0.0
        %1222 = vmatpush1.msra.mxu0 0.0
        %1223 = vmatprep.subr.mxu0 0.0
        %1224 = vmatpush1.msra.mxu0 0.0
        %1225 = vmatprep.subr.mxu0 0.0
        %1226 = vmatpush1.msra.mxu0 0.0
        %1227 = vmatprep.subr.mxu0 0.0
        %1228 = vmatpush1.msra.mxu0 0.0
        %1229 = vmatprep.subr.mxu0 0.0
        %1230 = vmatpush1.msra.mxu0 0.0
        %1231 = vmatprep.subr.mxu0 0.0
        %1232 = vmatpush1.msra.mxu0 0.0
        %1233 = vmatprep.subr.mxu0 0.0
        %1234 = vmatpush1.msra.mxu0 0.0
        %1235 = vmatprep.subr.mxu0 0.0
        %1236 = vmatpush1.msra.mxu0 0.0
        %1237 = vmatprep.subr.mxu0 0.0
        %1238 = vmatpush1.msra.mxu0 0.0
        %1239 = vmatprep.subr.mxu0 0.0
        %1240 = vmatpush1.msra.mxu0 0.0
        %1241 = vmatprep.subr.mxu0 0.0
        %1242 = vmatpush1.msra.mxu0 0.0
        %1243 = vmatprep.subr.mxu0 0.0
        %1244 = vmatpush1.msra.mxu0 0.0
        %1245 = vmatprep.subr.mxu0 0.0
        %1246 = vmatpush1.msra.mxu0 0.0
        %1247 = vmatprep.subr.mxu0 0.0
        %1248 = vmatpush1.msra.mxu0 0.0
        %1249 = vmatprep.subr.mxu0 0.0
        %1250 = vmatpush1.msra.mxu0 0.0
        %1251 = vmatprep.subr.mxu0 0.0
        %1252 = vmatpush1.msra.mxu0 0.0
        %1253 = vmatprep.subr.mxu0 0.0
        %1254 = vmatpush1.msra.mxu0 0.0
        %1255 = vmatprep.subr.mxu0 0.0
        %1256 = vmatpush1.msra.mxu0 0.0
        %1257 = vmatprep.subr.mxu0 0.0
        %1258 = vmatpush1.msra.mxu0 0.0
        %1259 = vmatprep.subr.mxu0 0.0
        %1260 = vmatpush1.msra.mxu0 0.0
        %1261 = vmatprep.subr.mxu0 0.0
        %1262 = vmatpush1.msra.mxu0 0.0
        %1263 = vmatprep.subr.mxu0 0.0
        %1264 = vmatpush1.msra.mxu0 0.0
        %1265 = vmatprep.subr.mxu0 0.0
        %1266 = vmatpush1.msra.mxu0 0.0
        %1267 = vmatprep.subr.mxu0 0.0
        %1268 = vmatpush1.msra.mxu0 0.0
        %1269 = vmatprep.subr.mxu0 0.0
        %1270 = vmatpush1.msra.mxu0 0.0
        %1271 = vmatprep.mubr.f32.mxu0 0.0
        %1272 = vmatmul.mubr.f32.gmra.mrb[0].mxu0 %v1205
        %v1273 = vpop.f32.mrb[0].mxu0
        %v1274 = vadd.f32 0.0, %v1273
        %v1275 = vpop.f32.mrb[0].mxu0
        %1276 = vdwg.mxu0
        %vm1277 = vcmask 523264
        %v1278 = vsel %vm1277, %v1274, -inf
        %1279 = vmax.xlane.f32.xlu0 %v1278
        %v1280 = vpop.xlane.xlu0 %1279
        %v1281 = vsub.f32 %v1274, %v1280
        %v1282 = vmul.f32 %v1281, 1.442695
        %v1283 = vpow.pop %v1282
        %v1284 = vsel %vm1277, %v1283, 0.0
        %1285 = vadd.xlane.f32.xlu0 %v1284
        %v1286 = vpop.xlane.xlu0 %1285
        %v1287 = vrcp.pop %v1286
        %v1288 = vmul.f32 %v1283, %v1287
        %v1290 = vsel %vm1277, %v1288, 0
        %v1293 = vsel %vm1277, %v1128, 0
        %v1296 = vsel %vm1277, %v1131, 0
        %v1299 = vsel %vm1277, %v1136, 0
        %v1302 = vsel %vm1277, %v1139, 0
        %1304 = vmatprep.subr.mxu0 0.0
        %1305 = vmatpush1.xpose.msra.mxu0 %v1293
        %1306 = vmatprep.subr.mxu0 0.0
        %1307 = vmatpush1.xpose.msra.mxu0 %v1296
        %1308 = vmatprep.subr.mxu0 0.0
        %1309 = vmatpush1.xpose.msra.mxu0 %v1299
        %1310 = vmatprep.subr.mxu0 0.0
        %1311 = vmatpush1.xpose.msra.mxu0 %v1302
        %1312 = vmatprep.subr.mxu0 0.0
        %1313 = vmatpush1.xpose.msra.mxu0 0.0
        %1314 = vmatprep.subr.mxu0 0.0
        %1315 = vmatpush1.xpose.msra.mxu0 0.0
        %1316 = vmatprep.subr.mxu0 0.0
        %1317 = vmatpush1.xpose.msra.mxu0 0.0
        %1318 = vmatprep.subr.mxu0 0.0
        %1319 = vmatpush1.xpose.msra.mxu0 0.0
        %1320 = vmatprep.subr.mxu0 0.0
        %1321 = vmatpush1.xpose.msra.mxu0 0.0
        %1322 = vmatprep.subr.mxu0 0.0
        %1323 = vmatpush1.xpose.msra.mxu0 0.0
        %1324 = vmatprep.subr.mxu0 0.0
        %1325 = vmatpush1.xpose.msra.mxu0 0.0
        %1326 = vmatprep.subr.mxu0 0.0
        %1327 = vmatpush1.xpose.msra.mxu0 0.0
        %1328 = vmatprep.subr.mxu0 0.0
        %1329 = vmatpush1.xpose.msra.mxu0 0.0
        %1330 = vmatprep.subr.mxu0 0.0
        %1331 = vmatpush1.xpose.msra.mxu0 0.0
        %1332 = vmatprep.subr.mxu0 0.0
        %1333 = vmatpush1.xpose.msra.mxu0 0.0
        %1334 = vmatprep.subr.mxu0 0.0
        %1335 = vmatpush1.xpose.msra.mxu0 0.0
        %1336 = vmatprep.subr.mxu0 0.0
        %1337 = vmatpush1.xpose.msra.mxu0 0.0
        %1338 = vmatprep.subr.mxu0 0.0
        %1339 = vmatpush1.xpose.msra.mxu0 0.0
        %1340 = vmatprep.subr.mxu0 0.0
        %1341 = vmatpush1.xpose.msra.mxu0 0.0
        %1342 = vmatprep.subr.mxu0 0.0
        %1343 = vmatpush1.xpose.msra.mxu0 0.0
        %1344 = vmatprep.subr.mxu0 0.0
        %1345 = vmatpush1.xpose.msra.mxu0 0.0
        %1346 = vmatprep.subr.mxu0 0.0
        %1347 = vmatpush1.xpose.msra.mxu0 0.0
        %1348 = vmatprep.subr.mxu0 0.0
        %1349 = vmatpush1.xpose.msra.mxu0 0.0
        %1350 = vmatprep.subr.mxu0 0.0
        %1351 = vmatpush1.xpose.msra.mxu0 0.0
        %1352 = vmatprep.subr.mxu0 0.0
        %1353 = vmatpush1.xpose.msra.mxu0 0.0
        %1354 = vmatprep.subr.mxu0 0.0
        %1355 = vmatpush1.xpose.msra.mxu0 0.0
        %1356 = vmatprep.subr.mxu0 0.0
        %1357 = vmatpush1.xpose.msra.mxu0 0.0
        %1358 = vmatprep.subr.mxu0 0.0
        %1359 = vmatpush1.xpose.msra.mxu0 0.0
        %1360 = vmatprep.subr.mxu0 0.0
        %1361 = vmatpush1.xpose.msra.mxu0 0.0
        %1362 = vmatprep.subr.mxu0 0.0
        %1363 = vmatpush1.xpose.msra.mxu0 0.0
        %1364 = vmatprep.subr.mxu0 0.0
        %1365 = vmatpush1.xpose.msra.mxu0 0.0
        %1366 = vmatprep.subr.mxu0 0.0
        %1367 = vmatpush1.xpose.msra.mxu0 0.0
        %1368 = vmatprep.mubr.f32.mxu0 0.0
        %1369 = vmatmul.mubr.f32.gmra.mrb[0].mxu0 %v1290
        %v1370 = vpop.f32.mrb[0].mxu0
        %v1371 = vadd.f32 %v1199, %v1370
        %v1372 = vpop.f32.mrb[0].mxu0
        %1373 = vdwg.mxu0
        %v1374 = vsel %vm1160, %v1371, 0.0
        %1375 = vadd.xlane.f32.xlu0 %v1374
        %v1376 = vpop.xlane.xlu0 %1375
        %v1377 = vrcp.pop 32.0
        %v1378 = vmul.f32 %v1376, %v1377
        %v1379 = vsub.f32 %v1371, %v1378
        %v1380 = vmul.f32 %v1379, %v1379
        %v1381 = vsel %vm1160, %v1380, 0.0
        %1382 = vadd.xlane.f32.xlu0 %v1381
        %v1383 = vpop.xlane.xlu0 %1382
        %v1384 = vmul.f32 %v1383, %v1377
        %v1385 = vadd.f32 %v1384, 1e-05
        %v1386 = vrsqrt.pop %v1385
        %v1387 = vmul.f32 %v1379, %v1386
        %v1389 = vlaneseq
        %v1390 = vshrl.u32 %v1389, 7
        %v1391 = vsub.s32 0, %v1390
        %v1392 = vrot.slane %v526, %v1391
        %v1394 = vmul.f32 %v1387, %v1392
        %v1396 = vlaneseq
        %v1397 = vshrl.u32 %v1396, 7
        %v1398 = vsub.s32 0, %v1397
        %v1399 = vrot.slane %v527, %v1398
        %v1401 = vadd.f32 %v1394, %v1399
        %v1403 = vlaneseq
        %v1404 = vshrl.u32 %v1403, 7
        %v1405 = vsub.s32 0, %v1404
        %v1406 = vrot.slane %v520, %v1405
        %v1409 = vsel %vm1160, %v1401, 0
        %1411 = vmatprep.subr.mxu0 0.0
        %1412 = vmatpush1.msra.mxu0 %v516
        %1413 = vmatprep.subr.mxu0 0.0
        %1414 = vmatpush1.msra.mxu0 %v517
        %1415 = vmatprep.subr.mxu0 0.0
        %1416 = vmatpush1.msra.mxu0 %v518
        %1417 = vmatprep.subr.mxu0 0.0
        %1418 = vmatpush1.msra.mxu0 %v519
        %1419 = vmatprep.subr.mxu0 0.0
        %1420 = vmatpush1.msra.mxu0 0.0
        %1421 = vmatprep.subr.mxu0 0.0
        %1422 = vmatpush1.msra.mxu0 0.0
        %1423 = vmatprep.subr.mxu0 0.0
        %1424 = vmatpush1.msra.mxu0 0.0
        %1425 = vmatprep.subr.mxu0 0.0
        %1426 = vmatpush1.msra.mxu0 0.0
        %1427 = vmatprep.subr.mxu0 0.0
        %1428 = vmatpush1.msra.mxu0 0.0
        %1429 = vmatprep.subr.mxu0 0.0
        %1430 = vmatpush1.msra.mxu0 0.0
        %1431 = vmatprep.subr.mxu0 0.0
        %1432 = vmatpush1.msra.mxu0 0.0
        %1433 = vmatprep.subr.mxu0 0.0
        %1434 = vmatpush1.msra.mxu0 0.0
        %1435 = vmatprep.subr.mxu0 0.0
        %1436 = vmatpush1.msra.mxu0 0.0
        %1437 = vmatprep.subr.mxu0 0.0
        %1438 = vmatpush1.msra.mxu0 0.0
        %1439 = vmatprep.subr.mxu0 0.0
        %1440 = vmatpush1.msra.mxu0 0.0
        %1441 = vmatprep.subr.mxu0 0.0
        %1442 = vmatpush1.msra.mxu0 0.0
        %1443 = vmatprep.subr.mxu0 0.0
        %1444 = vmatpush1.msra.mxu0 0.0
        %1445 = vmatprep.subr.mxu0 0.0
        %1446 = vmatpush1.msra.mxu0 0.0
        %1447 = vmatprep.subr.mxu0 0.0
        %1448 = vmatpush1.msra.mxu0 0.0
        %1449 = vmatprep.subr.mxu0 0.0
        %1450 = vmatpush1.msra.mxu0 0.0
        %1451 = vmatprep.subr.mxu0 0.0
        %1452 = vmatpush1.msra.mxu0 0.0
        %1453 = vmatprep.subr.mxu0 0.0
        %1454 = vmatpush1.msra.mxu0 0.0
        %1455 = vmatprep.subr.mxu0 0.0
        %1456 = vmatpush1.msra.mxu0 0.0
        %1457 = vmatprep.subr.mxu0 0.0
        %1458 = vmatpush1.msra.mxu0 0.0
        %1459 = vmatprep.subr.mxu0 0.0
        %1460 = vmatpush1.msra.mxu0 0.0
        %1461 = vmatprep.subr.mxu0 0.0
        %1462 = vmatpush1.msra.mxu0 0.0
        %1463 = vmatprep.subr.mxu0 0.0
        %1464 = vmatpush1.msra.mxu0 0.0
        %1465 = vmatprep.subr.mxu0 0.0
        %1466 = vmatpush1.msra.mxu0 0.0
        %1467 = vmatprep.subr.mxu0 0.0
        %1468 = vmatpush1.msra.mxu0 0.0
        %1469 = vmatprep.subr.mxu0 0.0
        %1470 = vmatpush1.msra.mxu0 0.0
        %1471 = vmatprep.subr.mxu0 0.0
        %1472 = vmatpush1.msra.mxu0 0.0
        %1473 = vmatprep.subr.mxu0 0.0
        %1474 = vmatpush1.msra.mxu0 0.0
        %1475 = vmatprep.mubr.f32.mxu0 0.0
        %1476 = vmatmul.mubr.f32.gmra.mrb[0].mxu0 %v1409
        %v1477 = vpop.f32.mrb[0].mxu0
        %v1478 = vadd.f32 %v1406, %v1477
        %v1479 = vpop.f32.mrb[0].mxu0
        %1480 = vdwg.mxu0
        %v1481 = vmax.f32 %v1478, 0.0
        %v1483 = vlaneseq
        %v1484 = vshrl.u32 %v1483, 7
        %v1485 = vsub.s32 0, %v1484
        %v1486 = vrot.slane %v525, %v1485
        %v1489 = vsel %vm1160, %v1481, 0
        %1491 = vmatprep.subr.mxu0 0.0
        %1492 = vmatpush1.msra.mxu0 %v521
        %1493 = vmatprep.subr.mxu0 0.0
        %1494 = vmatpush1.msra.mxu0 %v522
        %1495 = vmatprep.subr.mxu0 0.0
        %1496 = vmatpush1.msra.mxu0 %v523
        %1497 = vmatprep.subr.mxu0 0.0
        %1498 = vmatpush1.msra.mxu0 %v524
        %1499 = vmatprep.subr.mxu0 0.0
        %1500 = vmatpush1.msra.mxu0 0.0
        %1501 = vmatprep.subr.mxu0 0.0
        %1502 = vmatpush1.msra.mxu0 0.0
        %1503 = vmatprep.subr.mxu0 0.0
        %1504 = vmatpush1.msra.mxu0 0.0
        %1505 = vmatprep.subr.mxu0 0.0
        %1506 = vmatpush1.msra.mxu0 0.0
        %1507 = vmatprep.subr.mxu0 0.0
        %1508 = vmatpush1.msra.mxu0 0.0
        %1509 = vmatprep.subr.mxu0 0.0
        %1510 = vmatpush1.msra.mxu0 0.0
        %1511 = vmatprep.subr.mxu0 0.0
        %1512 = vmatpush1.msra.mxu0 0.0
        %1513 = vmatprep.subr.mxu0 0.0
        %1514 = vmatpush1.msra.mxu0 0.0
        %1515 = vmatprep.subr.mxu0 0.0
        %1516 = vmatpush1.msra.mxu0 0.0
        %1517 = vmatprep.subr.mxu0 0.0
        %1518 = vmatpush1.msra.mxu0 0.0
        %1519 = vmatprep.subr.mxu0 0.0
        %1520 = vmatpush1.msra.mxu0 0.0
        %1521 = vmatprep.subr.mxu0 0.0
        %1522 = vmatpush1.msra.mxu0 0.0
        %1523 = vmatprep.subr.mxu0 0.0
        %1524 = vmatpush1.msra.mxu0 0.0
        %1525 = vmatprep.subr.mxu0 0.0
        %1526 = vmatpush1.msra.mxu0 0.0
        %1527 = vmatprep.subr.mxu0 0.0
        %1528 = vmatpush1.msra.mxu0 0.0
        %1529 = vmatprep.subr.mxu0 0.0
        %1530 = vmatpush1.msra.mxu0 0.0
        %1531 = vmatprep.subr.mxu0 0.0
        %1532 = vmatpush1.msra.mxu0 0.0
        %1533 = vmatprep.subr.mxu0 0.0
        %1534 = vmatpush1.msra.mxu0 0.0
        %1535 = vmatprep.subr.mxu0 0.0
        %1536 = vmatpush1.msra.mxu0 0.0
        %1537 = vmatprep.subr.mxu0 0.0
        %1538 = vmatpush1.msra.mxu0 0.0
        %1539 = vmatprep.subr.mxu0 0.0
        %1540 = vmatpush1.msra.mxu0 0.0
        %1541 = vmatprep.subr.mxu0 0.0
        %1542 = vmatpush1.msra.mxu0 0.0
        %1543 = vmatprep.subr.mxu0 0.0
        %1544 = vmatpush1.msra.mxu0 0.0
        %1545 = vmatprep.subr.mxu0 0.0
        %1546 = vmatpush1.msra.mxu0 0.0
        %1547 = vmatprep.subr.mxu0 0.0
        %1548 = vmatpush1.msra.mxu0 0.0
        %1549 = vmatprep.subr.mxu0 0.0
        %1550 = vmatpush1.msra.mxu0 0.0
        %1551 = vmatprep.subr.mxu0 0.0
        %1552 = vmatpush1.msra.mxu0 0.0
        %1553 = vmatprep.subr.mxu0 0.0
        %1554 = vmatpush1.msra.mxu0 0.0
        %1555 = vmatprep.mubr.f32.mxu0 0.0
        %1556 = vmatmul.mubr.f32.gmra.mrb[0].mxu0 %v1489
        %v1557 = vpop.f32.mrb[0].mxu0
        %v1558 = vadd.f32 %v1486, %v1557
        %v1559 = vpop.f32.mrb[0].mxu0
        %1560 = vdwg.mxu0
        %v1561 = vadd.f32 %v1401, %v1558
        %v1562 = vsel %vm1160, %v1561, 0.0
        %1563 = vadd.xlane.f32.xlu0 %v1562
        %v1564 = vpop.xlane.xlu0 %1563
        %v1565 = vmul.f32 %v1564, %v1377
        %v1566 = vsub.f32 %v1561, %v1565
        %v1567 = vmul.f32 %v1566, %v1566
        %v1568 = vsel %vm1160, %v1567, 0.0
        %1569 = vadd.xlane.f32.xlu0 %v1568
        %v1570 = vpop.xlane.xlu0 %1569
        %v1571 = vmul.f32 %v1570, %v1377
        %v1572 = vadd.f32 %v1571, 1e-05
        %v1573 = vrsqrt.pop %v1572
        %v1574 = vmul.f32 %v1566, %v1573
        %v1576 = vlaneseq
        %v1577 = vshrl.u32 %v1576, 7
        %v1578 = vsub.s32 0, %v1577
        %v1579 = vrot.slane %v528, %v1578
        %v1581 = vmul.f32 %v1574, %v1579
        %v1583 = vlaneseq
        %v1584 = vshrl.u32 %v1583, 7
        %v1585 = vsub.s32 0, %v1584
        %v1586 = vrot.slane %v529, %v1585
        %v1588 = vadd.f32 %v1581, %v1586
        %1589 = vst.msk [vmem:[%s479] sm:$0xff] %vm1160, %v1588
        %s1590 = scalar_lea.vmem %s491, 384
        %v1591 = vld [vmem:[%s1590] sm:$0xf]
        %v1592 = vld [vmem:[%s1590 + $0x4] sm:$0xf]
        %v1593 = vld [vmem:[%s1590 + $0x8] sm:$0xf]
        %v1594 = vld [vmem:[%s1590 + $0xc] sm:$0xf]
        %v1595 = vld [vmem:[%s1590 + $0x10] sm:$0xf]
        %v1596 = vld [vmem:[%s1590 + $0x14] sm:$0xf]
        %v1597 = vld [vmem:[%s1590 + $0x18] sm:$0xf]
        %v1598 = vld [vmem:[%s1590 + $0x1c] sm:$0xf]
        %v1599 = vld [vmem:[%s1590 + $0x20] sm:$0xf]
        %v1600 = vld [vmem:[%s1590 + $0x24] sm:$0xf]
        %v1601 = vld [vmem:[%s1590 + $0x28] sm:$0xf]
        %v1602 = vld [vmem:[%s1590 + $0x2c] sm:$0xf]
        %v1603 = vld [vmem:[%s1590 + $0x30] sm:$0xf]
        %v1604 = vld [vmem:[%s1590 + $0x34] sm:$0xf]
        %v1605 = vld [vmem:[%s1590 + $0x38] sm:$0xf]
        %v1606 = vld [vmem:[%s1590 + $0x3c] sm:$0xf]
        %v1607 = vld [vmem:[%s1590 + $0x40] sm:$0xf]
        %v1608 = vld [vmem:[%s1590 + $0x44] sm:$0xf]
        %v1609 = vld [vmem:[%s1590 + $0x48] sm:$0xf]
        %v1610 = vld [vmem:[%s1590 + $0x4c] sm:$0xf]
        %v1611 = vld [vmem:[%s1590 + $0x50] sm:$0xf]
        %v1612 = vld [vmem:[%s1590 + $0x54] sm:$0xf]
        %v1613 = vld [vmem:[%s1590 + $0x58] sm:$0xf]
        %v1614 = vld [vmem:[%s1590 + $0x5c] sm:$0xf]
        %v1615 = vld [vmem:[%s1590 + $0x60] sm:$0xf]
        %v1616 = vld [vmem:[%s1590 + $0x64] sm:$0xf]
        %v1617 = vld [vmem:[%s1590 + $0x68] sm:$0xf]
        %v1618 = vld [vmem:[%s1590 + $0x6c] sm:$0xf]
        %v1619 = vld [vmem:[%s1590 + $0x70] sm:$0xf]
        %v1620 = vld [vmem:[%s1590 + $0x74] sm:$0xf]
        %v1621 = vld [vmem:[%s1590 + $0x78] sm:$0xf]
        %v1622 = vld [vmem:[%s1590 + $0x7c] sm:$0xf]
        %v1623 = vld [vmem:[%s1590 + $0x80] sm:$0xf]
        %v1624 = vld [vmem:[%s1590 + $0x84] sm:$0xf]
        %v1625 = vld [vmem:[%s1590 + $0x88] sm:$0xf]
        %v1626 = vld [vmem:[%s1590 + $0x8c] sm:$0xf]
        %v1627 = vld [vmem:[%s1590 + $0x90] sm:$0xf]
        %v1628 = vld [vmem:[%s1590 + $0x94] sm:$0xf]
        %v1629 = vld [vmem:[%s1590 + $0x98] sm:$0xf]
        %v1630 = vld [vmem:[%s1590 + $0x9c] sm:$0xf]
        %v1631 = vld [vmem:[%s1590 + $0xa0] sm:$0xf]
        %v1632 = vld [vmem:[%s1590 + $0xa4] sm:$0xf]
        %v1633 = vld [vmem:[%s1590 + $0xa8] sm:$0xf]
        %v1634 = vld [vmem:[%s1590 + $0xac] sm:$0xf]
        %v1635 = vld [vmem:[%s1590 + $0xb0] sm:$0xf]
        %v1636 = vld [vmem:[%s1590 + $0xb4] sm:$0xf]
        %v1637 = vld [vmem:[%s1590 + $0xb8] sm:$0xf]
        %v1638 = vld [vmem:[%s1590 + $0xbc] sm:$0xf]
        %v1639 = vld [vmem:[%s1590 + $0xc0] sm:$0xf]
        %v1640 = vld [vmem:[%s1590 + $0xc4] sm:$0xf]
        %v1641 = vld [vmem:[%s1590 + $0xc8] sm:$0xf]
        %v1642 = vld [vmem:[%s1590 + $0xcc] sm:$0xf]
        %v1643 = vld [vmem:[%s1590 + $0xd0] sm:$0xf]
        %v1644 = vld [vmem:[%s1590 + $0xd4] sm:$0xf]
        %v1645 = vld [vmem:[%s1590 + $0xd8] sm:$0xf]
        %v1646 = vld [vmem:[%s1590 + $0xdc] sm:$0xf]
        %v1647 = vld [vmem:[%s1590 + $0xe0] sm:$0xf]
        %v1648 = vld [vmem:[%s1590 + $0xe4] sm:$0xf]
        %v1649 = vld [vmem:[%s1590 + $0xe8] sm:$0xf]
        %v1650 = vld [vmem:[%s1590 + $0xec] sm:$0xf]
        %v1651 = vld [vmem:[%s1590 + $0xf0] sm:$0xf]
        %v1652 = vld [vmem:[%s1590 + $0xf4] sm:$0xf]
        %v1653 = vld [vmem:[%s1590 + $0xf8] sm:$0xf]
        %v1654 = vld [vmem:[%s1590 + $0xfc] sm:$0xf]
        %v1655 = vld [vmem:[%s1590 + $0x100] sm:$0xf]
        %v1656 = vld [vmem:[%s1590 + $0x104] sm:$0xf]
        %v1657 = vld [vmem:[%s1590 + $0x108] sm:$0xf]
        %v1658 = vld [vmem:[%s1590 + $0x10c] sm:$0xf]
        %v1659 = vld [vmem:[%s1590 + $0x110] sm:$0xf]
        %v1660 = vld [vmem:[%s1590 + $0x114] sm:$0xf]
        %v1661 = vld [vmem:[%s1590 + $0x118] sm:$0xf]
        %v1662 = vld [vmem:[%s1590 + $0x11c] sm:$0xf]
        %v1663 = vld [vmem:[%s1590 + $0x120] sm:$0xf]
        %v1664 = vld [vmem:[%s1590 + $0x124] sm:$0xf]
        %v1665 = vld [vmem:[%s1590 + $0x128] sm:$0xf]
        %v1666 = vld [vmem:[%s1590 + $0x12c] sm:$0xf]
        %v1667 = vld [vmem:[%s1590 + $0x130] sm:$0xf]
        %v1668 = vld [vmem:[%s1590 + $0x134] sm:$0xf]
        %v1669 = vld [vmem:[%s1590 + $0x138] sm:$0xf]
        %v1670 = vld [vmem:[%s1590 + $0x13c] sm:$0xf]
        %v1671 = vld [vmem:[%s1590 + $0x140] sm:$0xf]
        %v1672 = vld [vmem:[%s1590 + $0x144] sm:$0xf]
        %v1673 = vld [vmem:[%s1590 + $0x148] sm:$0xf]
        %v1674 = vld [vmem:[%s1590 + $0x14c] sm:$0xf]
        %v1675 = vld [vmem:[%s1590 + $0x150] sm:$0xf]
        %v1676 = vld [vmem:[%s1590 + $0x154] sm:$0xf]
        %v1677 = vld [vmem:[%s1590 + $0x158] sm:$0xf]
        %v1678 = vld [vmem:[%s1590 + $0x15c] sm:$0xf]
        %v1679 = vld [vmem:[%s1590 + $0x160] sm:$0xf]
        %v1680 = vld [vmem:[%s1590 + $0x164] sm:$0xf]
        %v1681 = vld [vmem:[%s1590 + $0x168] sm:$0xf]
        %v1682 = vld [vmem:[%s1590 + $0x16c] sm:$0xf]
        %v1683 = vld [vmem:[%s1590 + $0x170] sm:$0xf]
        %v1684 = vld [vmem:[%s1590 + $0x174] sm:$0xf]
        %v1685 = vld [vmem:[%s1590 + $0x178] sm:$0xf]
        %v1686 = vld [vmem:[%s1590 + $0x17c] sm:$0xf]
        %s1687 = scalar_lea.vmem %s484, 4
        %v1688 = vld [vmem:[%s1687] sm:$0xf]
        %v1785 = vunpack.c.l.b16 %v1591
        %v1786 = vunpack.c.l.b16 %v1592
        %v1787 = vunpack.c.l.b16 %v1593
        %v1788 = vunpack.c.l.b16 %v1594
        %v1789 = vunpack.c.l.b16 %v1595
        %v1790 = vunpack.c.l.b16 %v1596
        %v1791 = vunpack.c.l.b16 %v1597
        %v1792 = vunpack.c.l.b16 %v1598
        %v1793 = vunpack.c.l.b16 %v1599
        %v1794 = vunpack.c.l.b16 %v1600
        %v1795 = vunpack.c.l.b16 %v1601
        %v1796 = vunpack.c.l.b16 %v1602
        %v1797 = vunpack.c.l.b16 %v1603
        %v1798 = vunpack.c.l.b16 %v1604
        %v1799 = vunpack.c.l.b16 %v1605
        %v1800 = vunpack.c.l.b16 %v1606
        %v1801 = vunpack.c.l.b16 %v1607
        %v1802 = vunpack.c.l.b16 %v1608
        %v1803 = vunpack.c.l.b16 %v1609
        %v1804 = vunpack.c.l.b16 %v1610
        %v1805 = vunpack.c.l.b16 %v1611
        %v1806 = vunpack.c.l.b16 %v1612
        %v1807 = vunpack.c.l.b16 %v1613
        %v1808 = vunpack.c.l.b16 %v1614
        %v1809 = vunpack.c.l.b16 %v1615
        %v1810 = vunpack.c.l.b16 %v1616
        %v1811 = vunpack.c.l.b16 %v1617
        %v1812 = vunpack.c.l.b16 %v1618
        %v1813 = vunpack.c.l.b16 %v1619
        %v1814 = vunpack.c.l.b16 %v1620
        %v1815 = vunpack.c.l.b16 %v1621
        %v1816 = vunpack.c.l.b16 %v1622
        %v1817 = vunpack.c.l.b16 %v1623
        %v1818 = vunpack.c.l.b16 %v1624
        %v1819 = vunpack.c.l.b16 %v1625
        %v1820 = vunpack.c.l.b16 %v1626
        %v1821 = vunpack.c.l.b16 %v1627
        %v1822 = vunpack.c.l.b16 %v1628
        %v1823 = vunpack.c.l.b16 %v1629
        %v1824 = vunpack.c.l.b16 %v1630
        %v1825 = vunpack.c.l.b16 %v1631
        %v1826 = vunpack.c.l.b16 %v1632
        %v1827 = vunpack.c.l.b16 %v1633
        %v1828 = vunpack.c.l.b16 %v1634
        %v1829 = vunpack.c.l.b16 %v1635
        %v1830 = vunpack.c.l.b16 %v1636
        %v1831 = vunpack.c.l.b16 %v1637
        %v1832 = vunpack.c.l.b16 %v1638
        %v1833 = vunpack.c.l.b16 %v1639
        %v1834 = vunpack.c.l.b16 %v1640
        %v1835 = vunpack.c.l.b16 %v1641
        %v1836 = vunpack.c.l.b16 %v1642
        %v1837 = vunpack.c.l.b16 %v1643
        %v1838 = vunpack.c.l.b16 %v1644
        %v1839 = vunpack.c.l.b16 %v1645
        %v1840 = vunpack.c.l.b16 %v1646
        %v1841 = vunpack.c.l.b16 %v1647
        %v1842 = vunpack.c.l.b16 %v1648
        %v1843 = vunpack.c.l.b16 %v1649
        %v1844 = vunpack.c.l.b16 %v1650
        %v1845 = vunpack.c.l.b16 %v1651
        %v1846 = vunpack.c.l.b16 %v1652
        %v1847 = vunpack.c.l.b16 %v1653
        %v1848 = vunpack.c.l.b16 %v1654
        %v1849 = vunpack.c.l.b16 %v1655
        %v1850 = vunpack.c.l.b16 %v1656
        %v1851 = vunpack.c.l.b16 %v1657
        %v1852 = vunpack.c.l.b16 %v1658
        %v1853 = vunpack.c.l.b16 %v1659
        %v1854 = vunpack.c.l.b16 %v1660
        %v1855 = vunpack.c.l.b16 %v1661
        %v1856 = vunpack.c.l.b16 %v1662
        %v1857 = vunpack.c.l.b16 %v1663
        %v1858 = vunpack.c.l.b16 %v1664
        %v1859 = vunpack.c.l.b16 %v1665
        %v1860 = vunpack.c.l.b16 %v1666
        %v1861 = vunpack.c.l.b16 %v1667
        %v1862 = vunpack.c.l.b16 %v1668
        %v1863 = vunpack.c.l.b16 %v1669
        %v1864 = vunpack.c.l.b16 %v1670
        %v1865 = vunpack.c.l.b16 %v1671
        %v1866 = vunpack.c.l.b16 %v1672
        %v1867 = vunpack.c.l.b16 %v1673
        %v1868 = vunpack.c.l.b16 %v1674
        %v1869 = vunpack.c.l.b16 %v1675
        %v1870 = vunpack.c.l.b16 %v1676
        %v1871 = vunpack.c.l.b16 %v1677
        %v1872 = vunpack.c.l.b16 %v1678
        %v1873 = vunpack.c.l.b16 %v1679
        %v1874 = vunpack.c.l.b16 %v1680
        %v1875 = vunpack.c.l.b16 %v1681
        %v1876 = vunpack.c.l.b16 %v1682
        %v1877 = vunpack.c.l.b16 %v1683
        %v1878 = vunpack.c.l.b16 %v1684
        %v1879 = vunpack.c.l.b16 %v1685
        %v1880 = vunpack.c.l.b16 %v1686
        %v1881 = vpack.c.b16 %v1786, %v1785
        %v1882 = vpack.c.b16 %v1788, %v1787
        %v1883 = vpack.c.b16 %v1790, %v1789
        %v1884 = vpack.c.b16 %v1792, %v1791
        %v1885 = vpack.c.b16 %v1794, %v1793
        %v1886 = vpack.c.b16 %v1796, %v1795
        %v1887 = vpack.c.b16 %v1798, %v1797
        %v1888 = vpack.c.b16 %v1800, %v1799
        %v1889 = vpack.c.b16 %v1802, %v1801
        %v1890 = vpack.c.b16 %v1804, %v1803
        %v1891 = vpack.c.b16 %v1806, %v1805
        %v1892 = vpack.c.b16 %v1808, %v1807
        %v1893 = vpack.c.b16 %v1810, %v1809
        %v1894 = vpack.c.b16 %v1812, %v1811
        %v1895 = vpack.c.b16 %v1814, %v1813
        %v1896 = vpack.c.b16 %v1816, %v1815
        %v1897 = vpack.c.b16 %v1818, %v1817
        %v1898 = vpack.c.b16 %v1820, %v1819
        %v1899 = vpack.c.b16 %v1822, %v1821
        %v1900 = vpack.c.b16 %v1824, %v1823
        %v1901 = vpack.c.b16 %v1826, %v1825
        %v1902 = vpack.c.b16 %v1828, %v1827
        %v1903 = vpack.c.b16 %v1830, %v1829
        %v1904 = vpack.c.b16 %v1832, %v1831
        %v1905 = vpack.c.b16 %v1834, %v1833
        %v1906 = vpack.c.b16 %v1836, %v1835
        %v1907 = vpack.c.b16 %v1838, %v1837
        %v1908 = vpack.c.b16 %v1840, %v1839
        %v1909 = vpack.c.b16 %v1842, %v1841
        %v1910 = vpack.c.b16 %v1844, %v1843
        %v1911 = vpack.c.b16 %v1846, %v1845
        %v1912 = vpack.c.b16 %v1848, %v1847
        %v1913 = vpack.c.b16 %v1850, %v1849
        %v1914 = vpack.c.b16 %v1852, %v1851
        %v1915 = vpack.c.b16 %v1854, %v1853
        %v1916 = vpack.c.b16 %v1856, %v1855
        %v1917 = vpack.c.b16 %v1858, %v1857
        %v1918 = vpack.c.b16 %v1860, %v1859
        %v1919 = vpack.c.b16 %v1862, %v1861
        %v1920 = vpack.c.b16 %v1864, %v1863
        %v1921 = vpack.c.b16 %v1866, %v1865
        %v1922 = vpack.c.b16 %v1868, %v1867
        %v1923 = vpack.c.b16 %v1870, %v1869
        %v1924 = vpack.c.b16 %v1872, %v1871
        %v1925 = vpack.c.b16 %v1874, %v1873
        %v1926 = vpack.c.b16 %v1876, %v1875
        %v1927 = vpack.c.b16 %v1878, %v1877
        %v1928 = vpack.c.b16 %v1880, %v1879
        %1977 = vmatprep.subr.bf16.mxu0 0
        %1978 = vmatpush1.bf16.msra.mxu0 %v1881
        %1979 = vmatprep.subr.bf16.mxu0 0
        %1980 = vmatpush1.bf16.msra.mxu0 %v1882
        %1981 = vmatprep.subr.bf16.mxu0 0
        %1982 = vmatpush1.bf16.msra.mxu0 %v1883
        %1983 = vmatprep.subr.bf16.mxu0 0
        %1984 = vmatpush1.bf16.msra.mxu0 %v1884
        %1985 = vmatprep.subr.bf16.mxu0 0
        %1986 = vmatpush1.bf16.msra.mxu0 %v1885
        %1987 = vmatprep.subr.bf16.mxu0 0
        %1988 = vmatpush1.bf16.msra.mxu0 %v1886
        %1989 = vmatprep.subr.bf16.mxu0 0
        %1990 = vmatpush1.bf16.msra.mxu0 %v1887
        %1991 = vmatprep.subr.bf16.mxu0 0
        %1992 = vmatpush1.bf16.msra.mxu0 %v1888
        %1993 = vmatprep.subr.bf16.mxu0 0
        %1994 = vmatpush1.bf16.msra.mxu0 %v1889
        %1995 = vmatprep.subr.bf16.mxu0 0
        %1996 = vmatpush1.bf16.msra.mxu0 %v1890
        %1997 = vmatprep.subr.bf16.mxu0 0
        %1998 = vmatpush1.bf16.msra.mxu0 %v1891
        %1999 = vmatprep.subr.bf16.mxu0 0
        %2000 = vmatpush1.bf16.msra.mxu0 %v1892
        %2001 = vmatprep.subr.bf16.mxu0 0
        %2002 = vmatpush1.bf16.msra.mxu0 %v1893
        %2003 = vmatprep.subr.bf16.mxu0 0
        %2004 = vmatpush1.bf16.msra.mxu0 %v1894
        %2005 = vmatprep.subr.bf16.mxu0 0
        %2006 = vmatpush1.bf16.msra.mxu0 %v1895
        %2007 = vmatprep.subr.bf16.mxu0 0
        %2008 = vmatpush1.bf16.msra.mxu0 %v1896
        %2009 = vmatprep.mubr.bf16.mxu0 %v684
        %2010 = vmatmul.mubr.bf16.gmra.mrb[0].mxu0 %v683
        %v2011 = vpop.f32.mrb[0].mxu0
        %v2012 = vadd.f32 %v630, %v2011
        %v2013 = vpop.f32.mrb[0].mxu0
        %v2014 = vpop.f32.mrb[0].mxu0
        %v2015 = vadd.f32 %v635, %v2014
        %v2016 = vpop.f32.mrb[0].mxu0
        %2017 = vmatprep.mubr.bf16.mxu0 %v690
        %2018 = vmatmul.mubr.bf16.gmra.mrb[0].mxu0 %v689
        %v2019 = vpop.f32.mrb[0].mxu0
        %v2020 = vadd.f32 %v640, %v2019
        %v2021 = vpop.f32.mrb[0].mxu0
        %v2022 = vpop.f32.mrb[0].mxu0
        %v2023 = vadd.f32 %v645, %v2022
        %v2024 = vpop.f32.mrb[0].mxu0
        %2025 = vdwg.mxu0
        %2026 = vmatprep.subr.bf16.mxu0 0
        %2027 = vmatpush1.bf16.msra.mxu0 %v1897
        %2028 = vmatprep.subr.bf16.mxu0 0
        %2029 = vmatpush1.bf16.msra.mxu0 %v1898
        %2030 = vmatprep.subr.bf16.mxu0 0
        %2031 = vmatpush1.bf16.msra.mxu0 %v1899
        %2032 = vmatprep.subr.bf16.mxu0 0
        %2033 = vmatpush1.bf16.msra.mxu0 %v1900
        %2034 = vmatprep.subr.bf16.mxu0 0
        %2035 = vmatpush1.bf16.msra.mxu0 %v1901
        %2036 = vmatprep.subr.bf16.mxu0 0
        %2037 = vmatpush1.bf16.msra.mxu0 %v1902
        %2038 = vmatprep.subr.bf16.mxu0 0
        %2039 = vmatpush1.bf16.msra.mxu0 %v1903
        %2040 = vmatprep.subr.bf16.mxu0 0
        %2041 = vmatpush1.bf16.msra.mxu0 %v1904
        %2042 = vmatprep.subr.bf16.mxu0 0
        %2043 = vmatpush1.bf16.msra.mxu0 %v1905
        %2044 = vmatprep.subr.bf16.mxu0 0
        %2045 = vmatpush1.bf16.msra.mxu0 %v1906
        %2046 = vmatprep.subr.bf16.mxu0 0
        %2047 = vmatpush1.bf16.msra.mxu0 %v1907
        %2048 = vmatprep.subr.bf16.mxu0 0
        %2049 = vmatpush1.bf16.msra.mxu0 %v1908
        %2050 = vmatprep.subr.bf16.mxu0 0
        %2051 = vmatpush1.bf16.msra.mxu0 %v1909
        %2052 = vmatprep.subr.bf16.mxu0 0
        %2053 = vmatpush1.bf16.msra.mxu0 %v1910
        %2054 = vmatprep.subr.bf16.mxu0 0
        %2055 = vmatpush1.bf16.msra.mxu0 %v1911
        %2056 = vmatprep.subr.bf16.mxu0 0
        %2057 = vmatpush1.bf16.msra.mxu0 %v1912
        %2058 = vmatprep.mubr.bf16.mxu0 %v686
        %2059 = vmatmul.mubr.bf16.gmra.mrb[0].mxu0 %v685
        %v2060 = vpop.f32.mrb[0].mxu0
        %v2061 = vadd.f32 %v2012, %v2060
        %v2062 = vpop.f32.mrb[0].mxu0
        %v2063 = vpop.f32.mrb[0].mxu0
        %v2064 = vadd.f32 %v2015, %v2063
        %v2065 = vpop.f32.mrb[0].mxu0
        %2066 = vmatprep.mubr.bf16.mxu0 %v692
        %2067 = vmatmul.mubr.bf16.gmra.mrb[0].mxu0 %v691
        %v2068 = vpop.f32.mrb[0].mxu0
        %v2069 = vadd.f32 %v2020, %v2068
        %v2070 = vpop.f32.mrb[0].mxu0
        %v2071 = vpop.f32.mrb[0].mxu0
        %v2072 = vadd.f32 %v2023, %v2071
        %v2073 = vpop.f32.mrb[0].mxu0
        %2074 = vdwg.mxu0
        %2075 = vmatprep.subr.bf16.mxu0 0
        %2076 = vmatpush1.bf16.msra.mxu0 %v1913
        %2077 = vmatprep.subr.bf16.mxu0 0
        %2078 = vmatpush1.bf16.msra.mxu0 %v1914
        %2079 = vmatprep.subr.bf16.mxu0 0
        %2080 = vmatpush1.bf16.msra.mxu0 %v1915
        %2081 = vmatprep.subr.bf16.mxu0 0
        %2082 = vmatpush1.bf16.msra.mxu0 %v1916
        %2083 = vmatprep.subr.bf16.mxu0 0
        %2084 = vmatpush1.bf16.msra.mxu0 %v1917
        %2085 = vmatprep.subr.bf16.mxu0 0
        %2086 = vmatpush1.bf16.msra.mxu0 %v1918
        %2087 = vmatprep.subr.bf16.mxu0 0
        %2088 = vmatpush1.bf16.msra.mxu0 %v1919
        %2089 = vmatprep.subr.bf16.mxu0 0
        %2090 = vmatpush1.bf16.msra.mxu0 %v1920
        %2091 = vmatprep.subr.bf16.mxu0 0
        %2092 = vmatpush1.bf16.msra.mxu0 %v1921
        %2093 = vmatprep.subr.bf16.mxu0 0
        %2094 = vmatpush1.bf16.msra.mxu0 %v1922
        %2095 = vmatprep.subr.bf16.mxu0 0
        %2096 = vmatpush1.bf16.msra.mxu0 %v1923
        %2097 = vmatprep.subr.bf16.mxu0 0
        %2098 = vmatpush1.bf16.msra.mxu0 %v1924
        %2099 = vmatprep.subr.bf16.mxu0 0
        %2100 = vmatpush1.bf16.msra.mxu0 %v1925
        %2101 = vmatprep.subr.bf16.mxu0 0
        %2102 = vmatpush1.bf16.msra.mxu0 %v1926
        %2103 = vmatprep.subr.bf16.mxu0 0
        %2104 = vmatpush1.bf16.msra.mxu0 %v1927
        %2105 = vmatprep.subr.bf16.mxu0 0
        %2106 = vmatpush1.bf16.msra.mxu0 %v1928
        %2107 = vmatprep.mubr.bf16.mxu0 %v688
        %2108 = vmatmul.mubr.bf16.gmra.mrb[0].mxu0 %v687
        %v2109 = vpop.f32.mrb[0].mxu0
        %v2110 = vadd.f32 %v2061, %v2109
        %v2111 = vpop.f32.mrb[0].mxu0
        %v2112 = vpop.f32.mrb[0].mxu0
        %v2113 = vadd.f32 %v2064, %v2112
        %v2114 = vpop.f32.mrb[0].mxu0
        %2115 = vmatprep.mubr.bf16.mxu0 %v694
        %2116 = vmatmul.mubr.bf16.gmra.mrb[0].mxu0 %v693
        %v2117 = vpop.f32.mrb[0].mxu0
        %v2118 = vadd.f32 %v2069, %v2117
        %v2119 = vpop.f32.mrb[0].mxu0
        %v2120 = vpop.f32.mrb[0].mxu0
        %v2121 = vadd.f32 %v2072, %v2120
        %v2122 = vpop.f32.mrb[0].mxu0
        %2123 = vdwg.mxu0
        %v2125 = vsel %vm1160, %v1688, 0
        %2127 = vmatprep.subr.bf16.mxu0 0
        %2128 = vmatpush1.bf16.msra.mxu0 %v1156
        %2129 = vmatprep.subr.bf16.mxu0 0
        %2130 = vmatpush1.bf16.msra.mxu0 %v1157
        %2131 = vmatprep.subr.bf16.mxu0 0
        %2132 = vmatpush1.bf16.msra.mxu0 0
        %2133 = vmatprep.subr.bf16.mxu0 0
        %2134 = vmatpush1.bf16.msra.mxu0 0
        %2135 = vmatprep.subr.bf16.mxu0 0
        %2136 = vmatpush1.bf16.msra.mxu0 0
        %2137 = vmatprep.subr.bf16.mxu0 0
        %2138 = vmatpush1.bf16.msra.mxu0 0
        %2139 = vmatprep.subr.bf16.mxu0 0
        %2140 = vmatpush1.bf16.msra.mxu0 0
        %2141 = vmatprep.subr.bf16.mxu0 0
        %2142 = vmatpush1.bf16.msra.mxu0 0
        %2143 = vmatprep.subr.bf16.mxu0 0
        %2144 = vmatpush1.bf16.msra.mxu0 0
        %2145 = vmatprep.subr.bf16.mxu0 0
        %2146 = vmatpush1.bf16.msra.mxu0 0
        %2147 = vmatprep.subr.bf16.mxu0 0
        %2148 = vmatpush1.bf16.msra.mxu0 0
        %2149 = vmatprep.subr.bf16.mxu0 0
        %2150 = vmatpush1.bf16.msra.mxu0 0
        %2151 = vmatprep.subr.bf16.mxu0 0
        %2152 = vmatpush1.bf16.msra.mxu0 0
        %2153 = vmatprep.subr.bf16.mxu0 0
        %2154 = vmatpush1.bf16.msra.mxu0 0
        %2155 = vmatprep.subr.bf16.mxu0 0
        %2156 = vmatpush1.bf16.msra.mxu0 0
        %2157 = vmatprep.subr.bf16.mxu0 0
        %2158 = vmatpush1.bf16.msra.mxu0 0
        %2159 = vmatprep.mubr.bf16.mxu0 0
        %2160 = vmatmul.mubr.bf16.gmra.mrb[0].mxu0 %v2125
        %v2161 = vpop.f32.mrb[0].mxu0
        %v2162 = vadd.f32 %v1146, %v2161
        %v2163 = vpop.f32.mrb[0].mxu0
        %v2164 = vpop.f32.mrb[0].mxu0
        %v2165 = vpop.f32.mrb[0].mxu0
        %2166 = vdwg.mxu0
        %v2168 = vsel %vm1160, %v2162, 0
        %2170 = vmatprep.subr.mxu0 0.0
        %2171 = vmatpush1.msra.mxu0 %v2110
        %2172 = vmatprep.subr.mxu0 0.0
        %2173 = vmatpush1.msra.mxu0 %v2113
        %2174 = vmatprep.subr.mxu0 0.0
        %2175 = vmatpush1.msra.mxu0 %v2118
        %2176 = vmatprep.subr.mxu0 0.0
        %2177 = vmatpush1.msra.mxu0 %v2121
        %2178 = vmatprep.subr.mxu0 0.0
        %2179 = vmatpush1.msra.mxu0 0.0
        %2180 = vmatprep.subr.mxu0 0.0
        %2181 = vmatpush1.msra.mxu0 0.0
        %2182 = vmatprep.subr.mxu0 0.0
        %2183 = vmatpush1.msra.mxu0 0.0
        %2184 = vmatprep.subr.mxu0 0.0
        %2185 = vmatpush1.msra.mxu0 0.0
        %2186 = vmatprep.subr.mxu0 0.0
        %2187 = vmatpush1.msra.mxu0 0.0
        %2188 = vmatprep.subr.mxu0 0.0
        %2189 = vmatpush1.msra.mxu0 0.0
        %2190 = vmatprep.subr.mxu0 0.0
        %2191 = vmatpush1.msra.mxu0 0.0
        %2192 = vmatprep.subr.mxu0 0.0
        %2193 = vmatpush1.msra.mxu0 0.0
        %2194 = vmatprep.subr.mxu0 0.0
        %2195 = vmatpush1.msra.mxu0 0.0
        %2196 = vmatprep.subr.mxu0 0.0
        %2197 = vmatpush1.msra.mxu0 0.0
        %2198 = vmatprep.subr.mxu0 0.0
        %2199 = vmatpush1.msra.mxu0 0.0
        %2200 = vmatprep.subr.mxu0 0.0
        %2201 = vmatpush1.msra.mxu0 0.0
        %2202 = vmatprep.subr.mxu0 0.0
        %2203 = vmatpush1.msra.mxu0 0.0
        %2204 = vmatprep.subr.mxu0 0.0
        %2205 = vmatpush1.msra.mxu0 0.0
        %2206 = vmatprep.subr.mxu0 0.0
        %2207 = vmatpush1.msra.mxu0 0.0
        %2208 = vmatprep.subr.mxu0 0.0
        %2209 = vmatpush1.msra.mxu0 0.0
        %2210 = vmatprep.subr.mxu0 0.0
        %2211 = vmatpush1.msra.mxu0 0.0
        %2212 = vmatprep.subr.mxu0 0.0
        %2213 = vmatpush1.msra.mxu0 0.0
        %2214 = vmatprep.subr.mxu0 0.0
        %2215 = vmatpush1.msra.mxu0 0.0
        %2216 = vmatprep.subr.mxu0 0.0
        %2217 = vmatpush1.msra.mxu0 0.0
        %2218 = vmatprep.subr.mxu0 0.0
        %2219 = vmatpush1.msra.mxu0 0.0
        %2220 = vmatprep.subr.mxu0 0.0
        %2221 = vmatpush1.msra.mxu0 0.0
        %2222 = vmatprep.subr.mxu0 0.0
        %2223 = vmatpush1.msra.mxu0 0.0
        %2224 = vmatprep.subr.mxu0 0.0
        %2225 = vmatpush1.msra.mxu0 0.0
        %2226 = vmatprep.subr.mxu0 0.0
        %2227 = vmatpush1.msra.mxu0 0.0
        %2228 = vmatprep.subr.mxu0 0.0
        %2229 = vmatpush1.msra.mxu0 0.0
        %2230 = vmatprep.subr.mxu0 0.0
        %2231 = vmatpush1.msra.mxu0 0.0
        %2232 = vmatprep.subr.mxu0 0.0
        %2233 = vmatpush1.msra.mxu0 0.0
        %2234 = vmatprep.mubr.f32.mxu0 0.0
        %2235 = vmatmul.mubr.f32.gmra.mrb[0].mxu0 %v2168
        %v2236 = vpop.f32.mrb[0].mxu0
        %v2237 = vadd.f32 0.0, %v2236
        %v2238 = vpop.f32.mrb[0].mxu0
        %2239 = vdwg.mxu0
        %v2240 = vsel %vm1277, %v2237, -inf
        %2241 = vmax.xlane.f32.xlu0 %v2240
        %v2242 = vpop.xlane.xlu0 %2241
        %v2243 = vsub.f32 %v2237, %v2242
        %v2244 = vmul.f32 %v2243, 1.442695
        %v2245 = vpow.pop %v2244
        %v2246 = vsel %vm1277, %v2245, 0.0
        %2247 = vadd.xlane.f32.xlu0 %v2246
        %v2248 = vpop.xlane.xlu0 %2247
        %v2249 = vrcp.pop %v2248
        %v2250 = vmul.f32 %v2245, %v2249
        %v2252 = vsel %vm1277, %v2250, 0
        %v2255 = vsel %vm1277, %v2110, 0
        %v2258 = vsel %vm1277, %v2113, 0
        %v2261 = vsel %vm1277, %v2118, 0
        %v2264 = vsel %vm1277, %v2121, 0
        %2266 = vmatprep.subr.mxu0 0.0
        %2267 = vmatpush1.xpose.msra.mxu0 %v2255
        %2268 = vmatprep.subr.mxu0 0.0
        %2269 = vmatpush1.xpose.msra.mxu0 %v2258
        %2270 = vmatprep.subr.mxu0 0.0
        %2271 = vmatpush1.xpose.msra.mxu0 %v2261
        %2272 = vmatprep.subr.mxu0 0.0
        %2273 = vmatpush1.xpose.msra.mxu0 %v2264
        %2274 = vmatprep.subr.mxu0 0.0
        %2275 = vmatpush1.xpose.msra.mxu0 0.0
        %2276 = vmatprep.subr.mxu0 0.0
        %2277 = vmatpush1.xpose.msra.mxu0 0.0
        %2278 = vmatprep.subr.mxu0 0.0
        %2279 = vmatpush1.xpose.msra.mxu0 0.0
        %2280 = vmatprep.subr.mxu0 0.0
        %2281 = vmatpush1.xpose.msra.mxu0 0.0
        %2282 = vmatprep.subr.mxu0 0.0
        %2283 = vmatpush1.xpose.msra.mxu0 0.0
        %2284 = vmatprep.subr.mxu0 0.0
        %2285 = vmatpush1.xpose.msra.mxu0 0.0
        %2286 = vmatprep.subr.mxu0 0.0
        %2287 = vmatpush1.xpose.msra.mxu0 0.0
        %2288 = vmatprep.subr.mxu0 0.0
        %2289 = vmatpush1.xpose.msra.mxu0 0.0
        %2290 = vmatprep.subr.mxu0 0.0
        %2291 = vmatpush1.xpose.msra.mxu0 0.0
        %2292 = vmatprep.subr.mxu0 0.0
        %2293 = vmatpush1.xpose.msra.mxu0 0.0
        %2294 = vmatprep.subr.mxu0 0.0
        %2295 = vmatpush1.xpose.msra.mxu0 0.0
        %2296 = vmatprep.subr.mxu0 0.0
        %2297 = vmatpush1.xpose.msra.mxu0 0.0
        %2298 = vmatprep.subr.mxu0 0.0
        %2299 = vmatpush1.xpose.msra.mxu0 0.0
        %2300 = vmatprep.subr.mxu0 0.0
        %2301 = vmatpush1.xpose.msra.mxu0 0.0
        %2302 = vmatprep.subr.mxu0 0.0
        %2303 = vmatpush1.xpose.msra.mxu0 0.0
        %2304 = vmatprep.subr.mxu0 0.0
        %2305 = vmatpush1.xpose.msra.mxu0 0.0
        %2306 = vmatprep.subr.mxu0 0.0
        %2307 = vmatpush1.xpose.msra.mxu0 0.0
        %2308 = vmatprep.subr.mxu0 0.0
        %2309 = vmatpush1.xpose.msra.mxu0 0.0
        %2310 = vmatprep.subr.mxu0 0.0
        %2311 = vmatpush1.xpose.msra.mxu0 0.0
        %2312 = vmatprep.subr.mxu0 0.0
        %2313 = vmatpush1.xpose.msra.mxu0 0.0
        %2314 = vmatprep.subr.mxu0 0.0
        %2315 = vmatpush1.xpose.msra.mxu0 0.0
        %2316 = vmatprep.subr.mxu0 0.0
        %2317 = vmatpush1.xpose.msra.mxu0 0.0
        %2318 = vmatprep.subr.mxu0 0.0
        %2319 = vmatpush1.xpose.msra.mxu0 0.0
        %2320 = vmatprep.subr.mxu0 0.0
        %2321 = vmatpush1.xpose.msra.mxu0 0.0
        %2322 = vmatprep.subr.mxu0 0.0
        %2323 = vmatpush1.xpose.msra.mxu0 0.0
        %2324 = vmatprep.subr.mxu0 0.0
        %2325 = vmatpush1.xpose.msra.mxu0 0.0
        %2326 = vmatprep.subr.mxu0 0.0
        %2327 = vmatpush1.xpose.msra.mxu0 0.0
        %2328 = vmatprep.subr.mxu0 0.0
        %2329 = vmatpush1.xpose.msra.mxu0 0.0
        %2330 = vmatprep.mubr.f32.mxu0 0.0
        %2331 = vmatmul.mubr.f32.gmra.mrb[0].mxu0 %v2252
        %v2332 = vpop.f32.mrb[0].mxu0
        %v2333 = vadd.f32 %v2162, %v2332
        %v2334 = vpop.f32.mrb[0].mxu0
        %2335 = vdwg.mxu0
        %v2336 = vsel %vm1160, %v2333, 0.0
        %2337 = vadd.xlane.f32.xlu0 %v2336
        %v2338 = vpop.xlane.xlu0 %2337
        %v2339 = vmul.f32 %v2338, %v1377
        %v2340 = vsub.f32 %v2333, %v2339
        %v2341 = vmul.f32 %v2340, %v2340
        %v2342 = vsel %vm1160, %v2341, 0.0
        %2343 = vadd.xlane.f32.xlu0 %v2342
        %v2344 = vpop.xlane.xlu0 %2343
        %v2345 = vmul.f32 %v2344, %v1377
        %v2346 = vadd.f32 %v2345, 1e-05
        %v2347 = vrsqrt.pop %v2346
        %v2348 = vmul.f32 %v2340, %v2347
        %v2349 = vmul.f32 %v2348, %v1392
        %v2350 = vadd.f32 %v2349, %v1399
        %v2352 = vsel %vm1160, %v2350, 0
        %2354 = vmatprep.subr.mxu0 0.0
        %2355 = vmatpush1.msra.mxu0 %v516
        %2356 = vmatprep.subr.mxu0 0.0
        %2357 = vmatpush1.msra.mxu0 %v517
        %2358 = vmatprep.subr.mxu0 0.0
        %2359 = vmatpush1.msra.mxu0 %v518
        %2360 = vmatprep.subr.mxu0 0.0
        %2361 = vmatpush1.msra.mxu0 %v519
        %2362 = vmatprep.subr.mxu0 0.0
        %2363 = vmatpush1.msra.mxu0 0.0
        %2364 = vmatprep.subr.mxu0 0.0
        %2365 = vmatpush1.msra.mxu0 0.0
        %2366 = vmatprep.subr.mxu0 0.0
        %2367 = vmatpush1.msra.mxu0 0.0
        %2368 = vmatprep.subr.mxu0 0.0
        %2369 = vmatpush1.msra.mxu0 0.0
        %2370 = vmatprep.subr.mxu0 0.0
        %2371 = vmatpush1.msra.mxu0 0.0
        %2372 = vmatprep.subr.mxu0 0.0
        %2373 = vmatpush1.msra.mxu0 0.0
        %2374 = vmatprep.subr.mxu0 0.0
        %2375 = vmatpush1.msra.mxu0 0.0
        %2376 = vmatprep.subr.mxu0 0.0
        %2377 = vmatpush1.msra.mxu0 0.0
        %2378 = vmatprep.subr.mxu0 0.0
        %2379 = vmatpush1.msra.mxu0 0.0
        %2380 = vmatprep.subr.mxu0 0.0
        %2381 = vmatpush1.msra.mxu0 0.0
        %2382 = vmatprep.subr.mxu0 0.0
        %2383 = vmatpush1.msra.mxu0 0.0
        %2384 = vmatprep.subr.mxu0 0.0
        %2385 = vmatpush1.msra.mxu0 0.0
        %2386 = vmatprep.subr.mxu0 0.0
        %2387 = vmatpush1.msra.mxu0 0.0
        %2388 = vmatprep.subr.mxu0 0.0
        %2389 = vmatpush1.msra.mxu0 0.0
        %2390 = vmatprep.subr.mxu0 0.0
        %2391 = vmatpush1.msra.mxu0 0.0
        %2392 = vmatprep.subr.mxu0 0.0
        %2393 = vmatpush1.msra.mxu0 0.0
        %2394 = vmatprep.subr.mxu0 0.0
        %2395 = vmatpush1.msra.mxu0 0.0
        %2396 = vmatprep.subr.mxu0 0.0
        %2397 = vmatpush1.msra.mxu0 0.0
        %2398 = vmatprep.subr.mxu0 0.0
        %2399 = vmatpush1.msra.mxu0 0.0
        %2400 = vmatprep.subr.mxu0 0.0
        %2401 = vmatpush1.msra.mxu0 0.0
        %2402 = vmatprep.subr.mxu0 0.0
        %2403 = vmatpush1.msra.mxu0 0.0
        %2404 = vmatprep.subr.mxu0 0.0
        %2405 = vmatpush1.msra.mxu0 0.0
        %2406 = vmatprep.subr.mxu0 0.0
        %2407 = vmatpush1.msra.mxu0 0.0
        %2408 = vmatprep.subr.mxu0 0.0
        %2409 = vmatpush1.msra.mxu0 0.0
        %2410 = vmatprep.subr.mxu0 0.0
        %2411 = vmatpush1.msra.mxu0 0.0
        %2412 = vmatprep.subr.mxu0 0.0
        %2413 = vmatpush1.msra.mxu0 0.0
        %2414 = vmatprep.subr.mxu0 0.0
        %2415 = vmatpush1.msra.mxu0 0.0
        %2416 = vmatprep.subr.mxu0 0.0
        %2417 = vmatpush1.msra.mxu0 0.0
        %2418 = vmatprep.mubr.f32.mxu0 0.0
        %2419 = vmatmul.mubr.f32.gmra.mrb[0].mxu0 %v2352
        %v2420 = vpop.f32.mrb[0].mxu0
        %v2421 = vadd.f32 %v1406, %v2420
        %v2422 = vpop.f32.mrb[0].mxu0
        %2423 = vdwg.mxu0
        %v2424 = vmax.f32 %v2421, 0.0
        %v2426 = vsel %vm1160, %v2424, 0
        %2428 = vmatprep.subr.mxu0 0.0
        %2429 = vmatpush1.msra.mxu0 %v521
        %2430 = vmatprep.subr.mxu0 0.0
        %2431 = vmatpush1.msra.mxu0 %v522
        %2432 = vmatprep.subr.mxu0 0.0
        %2433 = vmatpush1.msra.mxu0 %v523
        %2434 = vmatprep.subr.mxu0 0.0
        %2435 = vmatpush1.msra.mxu0 %v524
        %2436 = vmatprep.subr.mxu0 0.0
        %2437 = vmatpush1.msra.mxu0 0.0
        %2438 = vmatprep.subr.mxu0 0.0
        %2439 = vmatpush1.msra.mxu0 0.0
        %2440 = vmatprep.subr.mxu0 0.0
        %2441 = vmatpush1.msra.mxu0 0.0
        %2442 = vmatprep.subr.mxu0 0.0
        %2443 = vmatpush1.msra.mxu0 0.0
        %2444 = vmatprep.subr.mxu0 0.0
        %2445 = vmatpush1.msra.mxu0 0.0
        %2446 = vmatprep.subr.mxu0 0.0
        %2447 = vmatpush1.msra.mxu0 0.0
        %2448 = vmatprep.subr.mxu0 0.0
        %2449 = vmatpush1.msra.mxu0 0.0
        %2450 = vmatprep.subr.mxu0 0.0
        %2451 = vmatpush1.msra.mxu0 0.0
        %2452 = vmatprep.subr.mxu0 0.0
        %2453 = vmatpush1.msra.mxu0 0.0
        %2454 = vmatprep.subr.mxu0 0.0
        %2455 = vmatpush1.msra.mxu0 0.0
        %2456 = vmatprep.subr.mxu0 0.0
        %2457 = vmatpush1.msra.mxu0 0.0
        %2458 = vmatprep.subr.mxu0 0.0
        %2459 = vmatpush1.msra.mxu0 0.0
        %2460 = vmatprep.subr.mxu0 0.0
        %2461 = vmatpush1.msra.mxu0 0.0
        %2462 = vmatprep.subr.mxu0 0.0
        %2463 = vmatpush1.msra.mxu0 0.0
        %2464 = vmatprep.subr.mxu0 0.0
        %2465 = vmatpush1.msra.mxu0 0.0
        %2466 = vmatprep.subr.mxu0 0.0
        %2467 = vmatpush1.msra.mxu0 0.0
        %2468 = vmatprep.subr.mxu0 0.0
        %2469 = vmatpush1.msra.mxu0 0.0
        %2470 = vmatprep.subr.mxu0 0.0
        %2471 = vmatpush1.msra.mxu0 0.0
        %2472 = vmatprep.subr.mxu0 0.0
        %2473 = vmatpush1.msra.mxu0 0.0
        %2474 = vmatprep.subr.mxu0 0.0
        %2475 = vmatpush1.msra.mxu0 0.0
        %2476 = vmatprep.subr.mxu0 0.0
        %2477 = vmatpush1.msra.mxu0 0.0
        %2478 = vmatprep.subr.mxu0 0.0
        %2479 = vmatpush1.msra.mxu0 0.0
        %2480 = vmatprep.subr.mxu0 0.0
        %2481 = vmatpush1.msra.mxu0 0.0
        %2482 = vmatprep.subr.mxu0 0.0
        %2483 = vmatpush1.msra.mxu0 0.0
        %2484 = vmatprep.subr.mxu0 0.0
        %2485 = vmatpush1.msra.mxu0 0.0
        %2486 = vmatprep.subr.mxu0 0.0
        %2487 = vmatpush1.msra.mxu0 0.0
        %2488 = vmatprep.subr.mxu0 0.0
        %2489 = vmatpush1.msra.mxu0 0.0
        %2490 = vmatprep.subr.mxu0 0.0
        %2491 = vmatpush1.msra.mxu0 0.0
        %2492 = vmatprep.mubr.f32.mxu0 0.0
        %2493 = vmatmul.mubr.f32.gmra.mrb[0].mxu0 %v2426
        %v2494 = vpop.f32.mrb[0].mxu0
        %v2495 = vadd.f32 %v1486, %v2494
        %v2496 = vpop.f32.mrb[0].mxu0
        %2497 = vdwg.mxu0
        %v2498 = vadd.f32 %v2350, %v2495
        %v2499 = vsel %vm1160, %v2498, 0.0
        %2500 = vadd.xlane.f32.xlu0 %v2499
        %v2501 = vpop.xlane.xlu0 %2500
        %v2502 = vmul.f32 %v2501, %v1377
        %v2503 = vsub.f32 %v2498, %v2502
        %v2504 = vmul.f32 %v2503, %v2503
        %v2505 = vsel %vm1160, %v2504, 0.0
        %2506 = vadd.xlane.f32.xlu0 %v2505
        %v2507 = vpop.xlane.xlu0 %2506
        %v2508 = vmul.f32 %v2507, %v1377
        %v2509 = vadd.f32 %v2508, 1e-05
        %v2510 = vrsqrt.pop %v2509
        %v2511 = vmul.f32 %v2503, %v2510
        %v2512 = vmul.f32 %v2511, %v1579
        %v2513 = vadd.f32 %v2512, %v1586
        %s2514 = scalar_lea.vmem %s479, 8 [#allocation2]
        %2515 = vst.msk [vmem:[%s2514] sm:$0xff] %vm1160, %v2513
        %s2516 = sand.u32 %s340, 1
        %s2517 = scalar_lea.sflag [#allocation3], %s2516
        %s2518 = sand.u32 %s340, 1
        %s2519 = smul.addr %s2518, 16
        %s2520 = scalar_lea.vmem [#allocation2], %s2519
        // Predicated region
        $region77: #{tpu_custom_call.1} parent=75 // pred_check
          %p2521 = pneg %p350
        $region78: #{tpu_custom_call.1} parent=75 // pred_check_branch
          %2523 = sbr.rel (%p2521) target = $region80
        $region79: #{tpu_custom_call.1} parent=75 // pred_region
          %s2524 = smul.u32 2, %s28
          %s2526 = ssub.s32 256, 256
          %2527 = vsyncadd %s2517, %s2526
          %s2528 = smul.addr %s2524, 128
          %s2529 = scalar_lea.hbm %s14, %s2528
          %s2530 = sshll.u32 %s2520, 4
          %s2531 = int_to_ptr.vmem [resolvable:$true] %s2530
          %2536 = dma.vmem_to_hbm [thread:$0]  %s2531, 256, %s2529, %s2517, 128, 128, 8
        $region80: #{tpu_custom_call.1} parent=75 // pred_fallthru
          _
      $region76: #{tpu_custom_call.1} parent=5 // pred_fallthru
        _
      %p2537 = scmp.le.s32.totalorder 2, %s23
      // Predicated region
      $region81: #{tpu_custom_call.1} parent=5 // pred_check
        %p2538 = pneg %p2537
      $region82: #{tpu_custom_call.1} parent=5 // pred_check_branch
        %2540 = sbr.rel (%p2538) target = $region84
      $region83: #{tpu_custom_call.1} parent=5 // pred_region
        %s2541 = ssub.s32 %s23, 2
        // Predicated region
        $region85: #{tpu_custom_call.1} parent=83 // pred_check
          %p2542 = pneg %p356
        $region86: #{tpu_custom_call.1} parent=83 // pred_check_branch
          %2544 = sbr.rel (%p2542) target = $region88
        $region87: #{tpu_custom_call.1} parent=83 // pred_region
          %s2545 = sand.u32 %s341, 1
          %s2546 = scalar_lea.sflag [#allocation3], %s2545
          %s2547 = sand.u32 %s341, 1
          %s2548 = smul.addr %s2547, 16
          %s2549 = scalar_lea.vmem [#allocation2], %s2548
          %2550 = dma.done %s2546, 256
        $region88: #{tpu_custom_call.1} parent=83 // pred_fallthru
          _
      $region84: #{tpu_custom_call.1} parent=5 // pred_fallthru
        _
    $region6: #{tpu_custom_call.1} parent=1 // loop_footer
      %s27 = sadd.s32 1, %s23
    $region7: #{tpu_custom_call.1} parent=1 // loop_footer_branch
      %22 = sbr.rel target = $region3
    $region8: #{tpu_custom_call.1} parent=1 // loop_exit
      _
    %2551 = vsyncpa [#allocation3], 1
    %s2552 = scalar_lea.sflag [#allocation3], 1
    %2553 = vsyncpa %s2552, 1

</llo_original>
